<compile_context>
chip_gen: v7x
topology: tpu7x:2x2x1
jax: 0.10.0
libtpu: 0.0.40
codegen_flags: <defaults>
</compile_context>

<pallas_src>
import functools

import jax
import jax.numpy as jnp
from jax.experimental import pallas as pl
from jax.experimental.pallas import tpu as pltpu

MIN_EVIDENCE = 1e-5
LANE = 128


def _round_up(x, m):
    return ((x + m - 1) // m) * m


def evidential_kernel(n_total, z_ref, seg_ref, pos_ref, we_ref, wp_ref, b1_ref, g_ref):
    """One (core, tile) step: node MLP on a tile_n slab of nodes + pooled accumulate.

    z_ref  : [1, tile_n] int32     seg_ref: [1, tile_n] int32
    pos_ref: [tile_n, 3] f32       we_ref : [S, H_PAD]  (= emb @ W1_emb, col-padded)
    wp_ref : [3, H_PAD]            b1_ref : [1, H_PAD]
    g_ref  : [1, B_PAD, H_PAD]     per-core partial graph-sum accumulator (output)
    """
    core = pl.program_id(0)
    step = pl.program_id(1)
    tiles_per_core = pl.num_programs(1)
    tile = core * tiles_per_core + step          # un-clamped global tile index

    @pl.when(step == 0)
    def _init():
        g_ref[...] = jnp.zeros_like(g_ref)

    tile_n = z_ref.shape[1]
    n_species = we_ref.shape[0]
    b_pad = g_ref.shape[1]

    # --- species one-hot, lane-dense (transposed) orientation: [S, tile_n] ---
    z_row = z_ref[...]                                               # [1, tile_n]
    sp_iota = jax.lax.broadcasted_iota(jnp.int32, (n_species, tile_n), 0)
    onehot_t = (sp_iota == z_row).astype(jnp.float32)                # [S, tile_n]

    # --- node MLP: embedding gather fused as onehot^T @ (emb @ W1_emb) ---
    h = jax.lax.dot_general(onehot_t, we_ref[...],
                            (((0,), (0,)), ((), ())),
                            preferred_element_type=jnp.float32)      # [tile_n, H_PAD]
    h = h + jnp.dot(pos_ref[...], wp_ref[...],
                    preferred_element_type=jnp.float32)              # + pos @ W1_pos
    h = jnp.maximum(h + b1_ref[...], 0.0)                            # [tile_n, H_PAD]

    # --- mask ragged tail / duplicated clamped tiles (zero rows -> zero pooled) ---
    row_ids = tile * tile_n + jax.lax.broadcasted_iota(jnp.int32, (tile_n, 1), 0)
    h = jnp.where(row_ids < n_total, h, 0.0)

    # --- graph pooling: per-tile segment-sum as one-hot matmul on the MXU ---
    seg_row = seg_ref[...]                                           # [1, tile_n]
    b_iota = jax.lax.broadcasted_iota(jnp.int32, (b_pad, tile_n), 0)
    seg_onehot = (b_iota == seg_row).astype(jnp.float32)             # [B_PAD, tile_n]
    g_ref[...] += jnp.dot(seg_onehot, h,
                          preferred_element_type=jnp.float32)[None, :, :]


def pack_params(params):
    """One-time repack of model params into kernel layout (outside the jitted fwd)."""
    emb, w1, b1 = params["emb"], params["w1"], params["b1"]
    emb_dim = emb.shape[1]
    hidden = w1.shape[1]
    h_pad = _round_up(max(hidden, LANE), LANE)

    # Fold the embedding table into layer 1: emb[z] @ W1_emb == onehot(z) @ (emb @ W1_emb)
    we = emb.astype(jnp.float32) @ w1[:emb_dim].astype(jnp.float32)   # [S, hidden]
    wp = w1[emb_dim:].astype(jnp.float32)                             # [pos_dim, hidden]

    we_p = jnp.zeros((emb.shape[0], h_pad), jnp.float32).at[:, :hidden].set(we)
    wp_p = jnp.zeros((wp.shape[0], h_pad), jnp.float32).at[:, :hidden].set(wp)
    b1_p = jnp.zeros((1, h_pad), jnp.float32).at[0, :hidden].set(b1.astype(jnp.float32))

    return {"we": we_p, "wp": wp_p, "b1": b1_p,
            "w2": params["w2"].astype(jnp.float32),
            "b2": params["b2"].astype(jnp.float32)}


@functools.partial(jax.jit, static_argnames=("num_graphs", "tile_n", "n_cores"))
def evidential_forward(z, pos, batch, kparams, *, num_graphs, tile_n=512, n_cores=2):
    """z: [N] int32, pos: [N, 3] f32, batch: [N] int32 -> (mu, lam, alpha, beta) [B, D].

    Note: z must lie in [0, num_species); out-of-range species silently map to a
    zero embedding (the reference emb[z] would wrap/error instead).
    """
    assert tile_n % 128 == 0, "tile_n must be a multiple of 128 (lane tiling)"
    we, wp, b1, w2, b2 = (kparams["we"], kparams["wp"], kparams["b1"],
                          kparams["w2"], kparams["b2"])
    n = z.shape[0]
    pos_dim = pos.shape[1]
    hidden = w2.shape[0]
    h_pad = we.shape[1]
    b_pad = max(8, _round_up(num_graphs, 8))

    n_blocks = pl.cdiv(n, tile_n)                 # real N-tiles present in the inputs
    n_cores = max(1, min(n_cores, n_blocks))      # don't split finer than the tiles
    tiles_per_core = pl.cdiv(n_blocks, n_cores)
    last_block = n_blocks - 1

    # No wrapper-side padding/copies: [N]->[1,N] reshapes are metadata-only and pos
    # keeps its native last dim; the ragged tail is masked inside the kernel.
    z_row = z.astype(jnp.int32).reshape(1, n)
    seg_row = batch.astype(jnp.int32).reshape(1, n)
    pos_f = pos.astype(jnp.float32)

    def node_map_row(c, i):      # [1, N] streams (z, batch); clamp duplicated tiles
        return (0, jnp.minimum(c * tiles_per_core + i, last_block))

    def node_map_pos(c, i):      # [N, 3] stream
        return (jnp.minimum(c * tiles_per_core + i, last_block), 0)

    g_part = pl.pallas_call(
        functools.partial(evidential_kernel, n),
        out_shape=jax.ShapeDtypeStruct((n_cores, b_pad, h_pad), jnp.float32),
        grid_spec=pltpu.PrefetchScalarGridSpec(
            num_scalar_prefetch=0,
            grid=(n_cores, tiles_per_core),
            in_specs=[
                pl.BlockSpec((1, tile_n), node_map_row),          # z
                pl.BlockSpec((1, tile_n), node_map_row),          # batch / segment ids
                pl.BlockSpec((tile_n, pos_dim), node_map_pos),    # pos (native last dim)
                pl.BlockSpec(we.shape, lambda c, i: (0, 0)),      # emb @ W1_emb (resident)
                pl.BlockSpec(wp.shape, lambda c, i: (0, 0)),      # W1_pos       (resident)
                pl.BlockSpec(b1.shape, lambda c, i: (0, 0)),      # b1           (resident)
            ],
            out_specs=pl.BlockSpec((1, b_pad, h_pad), lambda c, i: (c, 0, 0)),
        ),
        compiler_params=pltpu.CompilerParams(
            dimension_semantics=("parallel", "arbitrary"),   # split-N cores x N tiles
            vmem_limit_bytes=32 * 1024 * 1024,               # safe on v5e/v6e/v7x
        ),
    )(z_row, seg_row, pos_f, we, wp, b1)

    # Combine split-N partial sums and run the tiny evidential head in plain JAX:
    # [B, hidden] @ [hidden, D, 4] is O(B*D) work and not worth a kernel.
    g = jnp.sum(g_part, axis=0)[:num_graphs, :hidden]
    out = jnp.einsum("bh,hdc->bdc", g, w2) + b2                      # [B, D, 4]
    sp = jax.nn.softplus
    mu = out[..., 0]
    lam = sp(out[..., 1]) + MIN_EVIDENCE
    alpha = sp(out[..., 2]) + MIN_EVIDENCE + 1.0
    beta = sp(out[..., 3]) + MIN_EVIDENCE
    return mu, lam, alpha, beta


def make_params(key, *, num_species, pos_dim, emb_dim, hidden, out_dim):
    k0, k1, k2 = jax.random.split(key, 3)
    hin = emb_dim + pos_dim
    emb = jax.random.normal(k0, (num_species, emb_dim), jnp.float32) * 0.1
    w1 = jax.random.normal(k1, (hin, hidden), jnp.float32) * (1.0 / jnp.sqrt(hin))
    b1 = jnp.zeros((hidden,), jnp.float32)
    w2 = jax.random.normal(k2, (hidden, out_dim, 4), jnp.float32) * (1.0 / jnp.sqrt(hidden))
    b2 = jnp.zeros((out_dim, 4), jnp.float32)
    return {"emb": emb, "w1": w1, "b1": b1, "w2": w2, "b2": b2}


def reference_forward(z, pos, batch, params, *, num_graphs):
    """Pure-JAX reference of the same synthetic graph model + evidential head."""
    emb, w1, b1, w2, b2 = (params["emb"], params["w1"], params["b1"],
                           params["w2"], params["b2"])
    feat = jnp.concatenate([emb[z], pos.astype(jnp.float32)], axis=-1)
    h = jnp.maximum(feat @ w1 + b1, 0.0)
    g = jnp.zeros((num_graphs, h.shape[1]), jnp.float32).at[batch].add(h)
    out = jnp.einsum("bh,hdc->bdc", g, w2) + b2                 # [B, D, 4]
    sp = jax.nn.softplus
    mu = out[..., 0]
    lam = sp(out[..., 1]) + MIN_EVIDENCE
    alpha = sp(out[..., 2]) + MIN_EVIDENCE + 1.0
    beta = sp(out[..., 3]) + MIN_EVIDENCE
    return mu, lam, alpha, beta


if __name__ == "__main__":
    key = jax.random.PRNGKey(0)
    kz, kp, kb, kw = jax.random.split(key, 4)

    # 1200 nodes -> 3 tiles of 512 -> 2 tiles per core: exercises both parallel
    # core indices, a partial (ragged) last tile, and a clamped duplicate tile.
    N = 1200
    B = 4              # graphs in the batch
    NUM_SPECIES = 16
    EMB_DIM = 13
    POS_DIM = 3
    HIDDEN = 32
    OUT_DIM = 2        # per-graph target dimension

    z = jax.random.randint(kz, (N,), 1, NUM_SPECIES, dtype=jnp.int32)
    pos = jax.random.normal(kp, (N, POS_DIM), jnp.float32)
    batch = jnp.sort(jax.random.randint(kb, (N,), 0, B, dtype=jnp.int32))

    params = make_params(kw, num_species=NUM_SPECIES, pos_dim=POS_DIM,
                         emb_dim=EMB_DIM, hidden=HIDDEN, out_dim=OUT_DIM)
    kparams = pack_params(params)

    outs = evidential_forward(z, pos, batch, kparams, num_graphs=B,
                              tile_n=512, n_cores=2)
    jax.block_until_ready(outs)

    # correctness check against the pure-JAX reference
    ref = reference_forward(z, pos, batch, params, num_graphs=B)
    for got, want in zip(outs, ref):
        assert got.shape == (B, OUT_DIM)
        assert jnp.allclose(got, want, atol=1e-3, rtol=1e-3)

    print("KERNEL_OK")
</pallas_src>

<mosaic_0001>
module attributes {stable_mosaic.version = 11 : i64} {
  func.func @evidential_kernel(%arg0: i32, %arg1: i32, %arg2: memref<1x512xi32, #tpu.memory_space<vmem>>, %arg3: memref<1x512xi32, #tpu.memory_space<vmem>>, %arg4: memref<512x3xf32, #tpu.memory_space<vmem>>, %arg5: memref<16x128xf32, #tpu.memory_space<vmem>>, %arg6: memref<3x128xf32, #tpu.memory_space<vmem>>, %arg7: memref<1x128xf32, #tpu.memory_space<vmem>>, %arg8: memref<1x8x128xf32, #tpu.memory_space<vmem>>) attributes {dimension_semantics = [#tpu.dimension_semantics<parallel>, #tpu.dimension_semantics<arbitrary>], iteration_bounds = array<i64: 2, 2>, scalar_prefetch = 0 : i64, scratch_operands = 0 : i64, tpu.core_type = #tpu.core_type<tc>, window_params = [{transform_indices = @transform_0, window_bounds = array<i64: 1, 512>}, {transform_indices = @transform_1, window_bounds = array<i64: 1, 512>}, {transform_indices = @transform_2, window_bounds = array<i64: 512, 3>}, {pipeline_mode = #tpu.pipeline_mode<synchronous>, transform_indices = @transform_3, window_bounds = array<i64: 16, 128>}, {pipeline_mode = #tpu.pipeline_mode<synchronous>, transform_indices = @transform_4, window_bounds = array<i64: 3, 128>}, {pipeline_mode = #tpu.pipeline_mode<synchronous>, transform_indices = @transform_5, window_bounds = array<i64: 1, 128>}, {transform_indices = @transform_6, window_bounds = array<i64: 1, 8, 128>}]} {
    %c2_i32 = arith.constant 2 : i32
    %0 = arith.muli %arg0, %c2_i32 : i32
    %1 = arith.addi %0, %arg1 : i32
    %c0_i32 = arith.constant 0 : i32
    %2 = arith.cmpi eq, %arg1, %c0_i32 : i32
    %3 = arith.extui %2 : i1 to i32
    %c0_i32_0 = arith.constant 0 : i32
    %4 = arith.cmpi ne, %3, %c0_i32_0 : i32
    scf.if %4 {
      %cst_22 = arith.constant 0.000000e+00 : f32
      %43 = vector.broadcast %cst_22 : f32 to vector<1x8x128xf32>
      %c0_23 = arith.constant 0 : index
      %c0_24 = arith.constant 0 : index
      %c0_25 = arith.constant 0 : index
      %44 = vector.load %arg8[%c0_23, %c0_24, %c0_25] : memref<1x8x128xf32, #tpu.memory_space<vmem>>, vector<1x8x128xf32>
      tpu.vector_store %arg8[%c0_23, %c0_24, %c0_25], %43 {strides = array<i32>} : memref<1x8x128xf32, #tpu.memory_space<vmem>>, vector<1x8x128xf32>,
    } else {
    }
    %c0 = arith.constant 0 : index
    %c0_1 = arith.constant 0 : index
    %5 = vector.load %arg2[%c0, %c0_1] : memref<1x512xi32, #tpu.memory_space<vmem>>, vector<1x512xi32>
    %6 = tpu.iota {dimensions = array<i32: 0>} : vector<16x512xi32>
    %7 = vector.broadcast %5 : vector<1x512xi32> to vector<16x512xi32>
    %8 = arith.cmpi eq, %6, %7 : vector<16x512xi32>
    %9 = arith.extui %8 : vector<16x512xi1> to vector<16x512xi32>
    %10 = arith.sitofp %9 : vector<16x512xi32> to vector<16x512xf32>
    %c0_2 = arith.constant 0 : index
    %c0_3 = arith.constant 0 : index
    %11 = vector.load %arg5[%c0_2, %c0_3] : memref<16x128xf32, #tpu.memory_space<vmem>>, vector<16x128xf32>
    %cst = arith.constant dense<0.000000e+00> : vector<512x128xf32>
    %12 = tpu.matmul %10, %11, %cst {dimension_numbers = #tpu.dot_dimension_numbers<[0], [0], [1], [1], [0, 1, 1, 1], [], []>} : vector<16x512xf32>, vector<16x128xf32>, vector<512x128xf32> -> vector<512x128xf32>
    %c0_4 = arith.constant 0 : index
    %c0_5 = arith.constant 0 : index
    %13 = vector.load %arg4[%c0_4, %c0_5] : memref<512x3xf32, #tpu.memory_space<vmem>>, vector<512x3xf32>
    %c0_6 = arith.constant 0 : index
    %c0_7 = arith.constant 0 : index
    %14 = vector.load %arg6[%c0_6, %c0_7] : memref<3x128xf32, #tpu.memory_space<vmem>>, vector<3x128xf32>
    %cst_8 = arith.constant dense<0.000000e+00> : vector<512x128xf32>
    %15 = tpu.matmul %13, %14, %cst_8 {dimension_numbers = #tpu.dot_dimension_numbers<[1], [0], [0], [1], [0, 0, 1, 1], [], []>} : vector<512x3xf32>, vector<3x128xf32>, vector<512x128xf32> -> vector<512x128xf32>
    %16 = arith.addf %12, %15 : vector<512x128xf32>
    %c0_9 = arith.constant 0 : index
    %c0_10 = arith.constant 0 : index
    %17 = vector.load %arg7[%c0_9, %c0_10] : memref<1x128xf32, #tpu.memory_space<vmem>>, vector<1x128xf32>
    %18 = vector.broadcast %17 : vector<1x128xf32> to vector<512x128xf32>
    %19 = arith.addf %16, %18 : vector<512x128xf32>
    %cst_11 = arith.constant 0.000000e+00 : f32
    %20 = vector.broadcast %cst_11 : f32 to vector<512x128xf32>
    %21 = arith.maximumf %19, %20 : vector<512x128xf32>
    %c512_i32 = arith.constant 512 : i32
    %22 = arith.muli %1, %c512_i32 : i32
    %23 = tpu.iota {dimensions = array<i32: 0>} : vector<512x1xi32>
    %24 = vector.broadcast %22 : i32 to vector<512x1xi32>
    %25 = arith.addi %24, %23 : vector<512x1xi32>
    %c1200_i32 = arith.constant 1200 : i32
    %26 = vector.broadcast %c1200_i32 : i32 to vector<512x1xi32>
    %27 = arith.cmpi slt, %25, %26 : vector<512x1xi32>
    %cst_12 = arith.constant 0.000000e+00 : f32
    %28 = vector.shape_cast %27 : vector<512x1xi1> to vector<512x1xi1>
    %29 = vector.broadcast %28 : vector<512x1xi1> to vector<512x128xi1>
    %30 = vector.broadcast %cst_12 : f32 to vector<512x128xf32>
    %31 = arith.select %29, %21, %30 : vector<512x128xi1>, vector<512x128xf32>
    %c0_13 = arith.constant 0 : index
    %c0_14 = arith.constant 0 : index
    %32 = vector.load %arg3[%c0_13, %c0_14] : memref<1x512xi32, #tpu.memory_space<vmem>>, vector<1x512xi32>
    %33 = tpu.iota {dimensions = array<i32: 0>} : vector<8x512xi32>
    %34 = vector.broadcast %32 : vector<1x512xi32> to vector<8x512xi32>
    %35 = arith.cmpi eq, %33, %34 : vector<8x512xi32>
    %36 = arith.extui %35 : vector<8x512xi1> to vector<8x512xi32>
    %37 = arith.sitofp %36 : vector<8x512xi32> to vector<8x512xf32>
    %c0_15 = arith.constant 0 : index
    %c0_16 = arith.constant 0 : index
    %c0_17 = arith.constant 0 : index
    %38 = vector.load %arg8[%c0_15, %c0_16, %c0_17] : memref<1x8x128xf32, #tpu.memory_space<vmem>>, vector<1x8x128xf32>
    %cst_18 = arith.constant dense<0.000000e+00> : vector<8x128xf32>
    %39 = tpu.matmul %37, %31, %cst_18 {dimension_numbers = #tpu.dot_dimension_numbers<[1], [0], [0], [1], [0, 0, 1, 1], [], []>} : vector<8x512xf32>, vector<512x128xf32>, vector<8x128xf32> -> vector<8x128xf32>
    %40 = vector.shape_cast %39 : vector<8x128xf32> to vector<1x8x128xf32>
    %41 = arith.addf %38, %40 : vector<1x8x128xf32>
    %c0_19 = arith.constant 0 : index
    %c0_20 = arith.constant 0 : index
    %c0_21 = arith.constant 0 : index
    %42 = vector.load %arg8[%c0_19, %c0_20, %c0_21] : memref<1x8x128xf32, #tpu.memory_space<vmem>>, vector<1x8x128xf32>
    tpu.vector_store %arg8[%c0_19, %c0_20, %c0_21], %41 {strides = array<i32>} : memref<1x8x128xf32, #tpu.memory_space<vmem>>, vector<1x8x128xf32>,
    return
  }
  func.func @transform_0(%arg0: i32, %arg1: i32) -> (i32, i32) {
    %c2_i32 = arith.constant 2 : i32
    %0 = arith.muli %arg0, %c2_i32 : i32
    %1 = arith.addi %0, %arg1 : i32
    %c2_i32_0 = arith.constant 2 : i32
    %2 = arith.minsi %1, %c2_i32_0 : i32
    %c0_i32 = arith.constant 0 : i32
    %c0_i32_1 = arith.constant 0 : i32
    return %c0_i32, %2 : i32, i32
  }
  func.func @transform_1(%arg0: i32, %arg1: i32) -> (i32, i32) {
    %c2_i32 = arith.constant 2 : i32
    %0 = arith.muli %arg0, %c2_i32 : i32
    %1 = arith.addi %0, %arg1 : i32
    %c2_i32_0 = arith.constant 2 : i32
    %2 = arith.minsi %1, %c2_i32_0 : i32
    %c0_i32 = arith.constant 0 : i32
    %c0_i32_1 = arith.constant 0 : i32
    return %c0_i32, %2 : i32, i32
  }
  func.func @transform_2(%arg0: i32, %arg1: i32) -> (i32, i32) {
    %c2_i32 = arith.constant 2 : i32
    %0 = arith.muli %arg0, %c2_i32 : i32
    %1 = arith.addi %0, %arg1 : i32
    %c2_i32_0 = arith.constant 2 : i32
    %2 = arith.minsi %1, %c2_i32_0 : i32
    %c0_i32 = arith.constant 0 : i32
    %c0_i32_1 = arith.constant 0 : i32
    return %2, %c0_i32 : i32, i32
  }
  func.func @transform_3(%arg0: i32, %arg1: i32) -> (i32, i32) {
    %c0_i32 = arith.constant 0 : i32
    %c0_i32_0 = arith.constant 0 : i32
    %c0_i32_1 = arith.constant 0 : i32
    return %c0_i32, %c0_i32_0 : i32, i32
  }
  func.func @transform_4(%arg0: i32, %arg1: i32) -> (i32, i32) {
    %c0_i32 = arith.constant 0 : i32
    %c0_i32_0 = arith.constant 0 : i32
    %c0_i32_1 = arith.constant 0 : i32
    return %c0_i32, %c0_i32_0 : i32, i32
  }
  func.func @transform_5(%arg0: i32, %arg1: i32) -> (i32, i32) {
    %c0_i32 = arith.constant 0 : i32
    %c0_i32_0 = arith.constant 0 : i32
    %c0_i32_1 = arith.constant 0 : i32
    return %c0_i32, %c0_i32_0 : i32, i32
  }
  func.func @transform_6(%arg0: i32, %arg1: i32) -> (i32, i32, i32) {
    %c0_i32 = arith.constant 0 : i32
    %c0_i32_0 = arith.constant 0 : i32
    %c0_i32_1 = arith.constant 0 : i32
    return %arg0, %c0_i32, %c0_i32_0 : i32, i32, i32
  }
}

</mosaic_0001>

<llo_original>
// kernel: evidential_forward.1
$region0: #{evidential_forward.1}
  #allocation0 [shape = 'u32[]', space=smem, size = 0x4, offset = 0x4, fixed_abs, tag = 'smem constant byte address 0x4 - core index']
  #allocation1 [shape = 'u32[144,128]{1,0:T(1,128)}', space=vmem, size = 0x12000, scoped, tag = 'internal scratch']
  %s0 = inlined_call_operand.vmem [shape: s32[1,1200], index: 0, kind: input, shape index: {}]
  %s1 = inlined_call_operand.vmem [shape: s32[1,1200], index: 1, kind: input, shape index: {}]
  %s2 = inlined_call_operand.vmem [shape: f32[1200,3], index: 2, kind: input, shape index: {}]
  %s3 = inlined_call_operand.vmem [shape: f32[16,128], index: 3, kind: input, shape index: {}]
  %s4 = inlined_call_operand.vmem [shape: f32[3,128], index: 4, kind: input, shape index: {}]
  %s5 = inlined_call_operand.vmem [shape: f32[1,128], index: 5, kind: input, shape index: {}]
  %s6 = inlined_call_operand.vmem [shape: f32[2,8,128], index: 6, kind: output, shape index: {}]
  %s7 = sld [smem:[#allocation0]]
  $region61: #{evidential_forward.1} parent=0
    _
  %s9 = ssub.s32 1, %s7
  %s10 = scalar_select 0, %s9, %s7
  loop: start=0, step=1, limit=6
  $region2: #{evidential_forward.1} parent=0 // loop_pre_header
    _
  $region3: #{evidential_forward.1} parent=0 // loop_header
    %s12 = sphi 0, %s16
    %p13 = scmp.ge.s32.totalorder %s12, 6
    %s19 = sphi 0, %s31
    %s20 = sphi 0, %s27
    %s21 = sphi 0, %s19
    %s22 = sphi 0, %s20
    %s23 = sphi 0, %s21
    %s24 = sphi 0, %s22
    %s42 = sphi 0, %s44
    %s45 = sphi 0, %s42
    %s46 = sphi 0, %s45
    %s62 = sphi 0, %s46
    %s76 = sphi 0, %s78
    %s79 = sphi 0, %s76
    %s80 = sphi 0, %s79
    %s96 = sphi 0, %s80
    %s110 = sphi 0, %s112
    %s113 = sphi 0, %s110
    %s114 = sphi 0, %s113
    %s130 = sphi 0, %s114
    %s134 = sphi 0, %s134
    %s136 = sphi 0, %s134
    %s137 = sphi 0, %s136
    %s151 = sphi 0, %s137
    %s155 = sphi 0, %s155
    %s157 = sphi 0, %s155
    %s158 = sphi 0, %s157
    %s172 = sphi 0, %s158
    %s176 = sphi 0, %s176
    %s178 = sphi 0, %s176
    %s179 = sphi 0, %s178
    %s193 = sphi 0, %s179
    %s199 = sphi 0, %s201
    %s202 = sphi 0, %s199
    %s203 = sphi 0, %s202
    %s219 = sphi 0, %s203
  $region4: #{evidential_forward.1} parent=0 // loop_header_branch
    %15 = sbr.rel (%p13) target = $region8
  $region5: #{evidential_forward.1} parent=0 // loop_body
    %s17 = ssub.s32 %s12, 1
    %s18 = ssub.s32 %s12, 2
    %s25 = sadd.s32 1, %s20
    %p26 = scmp.ge.s32.totalorder %s25, 2
    %s27 = scalar_select %p26, 0, %s25
    %s28 = sadd.s32 1, %s19
    %s29 = scalar_select %p26, %s28, %s19
    %p30 = scmp.ge.s32.totalorder %s29, 2
    %s31 = scalar_select %p30, 0, %s29
    %s32 = smul.u32 %s19, 2
    %s33 = sadd.s32 %s32, %s20
    %p34 = scmp.lt.s32.totalorder %s33, 2
    %s35 = scalar_select %p34, %s33, 2
    %s36 = smul.u32 %s31, 2
    %s37 = sadd.s32 %s36, %s27
    %p38 = scmp.lt.s32.totalorder %s37, 2
    %s39 = scalar_select %p38, %s37, 2
    %s40 = ssub.s32 %s35, %s39
    %p41 = scmp.eq.s32.totalorder %s40, 0
    %s43 = sadd.s32 %s42, 1
    %s44 = scalar_select %p41, %s42, %s43
    %p47 = pneg %p41
    %p48 = scmp.eq.s32.totalorder %s12, 3
    %p49 = por %p47, %p48
    %p50 = scmp.ne.s32.totalorder %s42, %s45
    %p51 = scmp.eq.s32.totalorder %s12, 0
    %p52 = por %p50, %p51
    %p53 = scmp.ne.s32.totalorder %s42, %s45
    %p54 = scmp.eq.s32.totalorder %s17, 3
    %p55 = por %p53, %p54
    %p56 = scmp.ne.s32.totalorder %s45, %s46
    %p57 = scmp.eq.s32.totalorder %s17, 0
    %p58 = por %p56, %p57
    %p59 = scmp.ne.s32.totalorder %s45, %s46
    %p60 = scmp.eq.s32.totalorder %s18, 3
    %p61 = por %p59, %p60
    %p63 = scmp.ne.s32.totalorder %s46, %s62
    %p64 = scmp.eq.s32.totalorder %s18, 0
    %p65 = por %p63, %p64
    %s66 = smul.u32 %s19, 2
    %s67 = sadd.s32 %s66, %s20
    %p68 = scmp.lt.s32.totalorder %s67, 2
    %s69 = scalar_select %p68, %s67, 2
    %s70 = smul.u32 %s31, 2
    %s71 = sadd.s32 %s70, %s27
    %p72 = scmp.lt.s32.totalorder %s71, 2
    %s73 = scalar_select %p72, %s71, 2
    %s74 = ssub.s32 %s69, %s73
    %p75 = scmp.eq.s32.totalorder %s74, 0
    %s77 = sadd.s32 %s76, 1
    %s78 = scalar_select %p75, %s76, %s77
    %p81 = pneg %p75
    %p82 = scmp.eq.s32.totalorder %s12, 3
    %p83 = por %p81, %p82
    %p84 = scmp.ne.s32.totalorder %s76, %s79
    %p85 = scmp.eq.s32.totalorder %s12, 0
    %p86 = por %p84, %p85
    %p87 = scmp.ne.s32.totalorder %s76, %s79
    %p88 = scmp.eq.s32.totalorder %s17, 3
    %p89 = por %p87, %p88
    %p90 = scmp.ne.s32.totalorder %s79, %s80
    %p91 = scmp.eq.s32.totalorder %s17, 0
    %p92 = por %p90, %p91
    %p93 = scmp.ne.s32.totalorder %s79, %s80
    %p94 = scmp.eq.s32.totalorder %s18, 3
    %p95 = por %p93, %p94
    %p97 = scmp.ne.s32.totalorder %s80, %s96
    %p98 = scmp.eq.s32.totalorder %s18, 0
    %p99 = por %p97, %p98
    %s100 = smul.u32 %s19, 2
    %s101 = sadd.s32 %s100, %s20
    %p102 = scmp.lt.s32.totalorder %s101, 2
    %s103 = scalar_select %p102, %s101, 2
    %s104 = smul.u32 %s31, 2
    %s105 = sadd.s32 %s104, %s27
    %p106 = scmp.lt.s32.totalorder %s105, 2
    %s107 = scalar_select %p106, %s105, 2
    %s108 = ssub.s32 %s103, %s107
    %p109 = scmp.eq.s32.totalorder %s108, 0
    %s111 = sadd.s32 %s110, 1
    %s112 = scalar_select %p109, %s110, %s111
    %p115 = pneg %p109
    %p116 = scmp.eq.s32.totalorder %s12, 3
    %p117 = por %p115, %p116
    %p118 = scmp.ne.s32.totalorder %s110, %s113
    %p119 = scmp.eq.s32.totalorder %s12, 0
    %p120 = por %p118, %p119
    %p121 = scmp.ne.s32.totalorder %s110, %s113
    %p122 = scmp.eq.s32.totalorder %s17, 3
    %p123 = por %p121, %p122
    %p124 = scmp.ne.s32.totalorder %s113, %s114
    %p125 = scmp.eq.s32.totalorder %s17, 0
    %p126 = por %p124, %p125
    %p127 = scmp.ne.s32.totalorder %s113, %s114
    %p128 = scmp.eq.s32.totalorder %s18, 3
    %p129 = por %p127, %p128
    %p131 = scmp.ne.s32.totalorder %s114, %s130
    %p132 = scmp.eq.s32.totalorder %s18, 0
    %p133 = por %p131, %p132
    %s135 = sadd.s32 %s134, 1
    %p138 = scmp.eq.s32.totalorder %s12, 3
    %p139 = scmp.ne.s32.totalorder %s134, %s136
    %p140 = scmp.eq.s32.totalorder %s12, 0
    %p141 = por %p139, %p140
    %p142 = scmp.ne.s32.totalorder %s134, %s136
    %p143 = scmp.eq.s32.totalorder %s17, 3
    %p144 = por %p142, %p143
    %p145 = scmp.ne.s32.totalorder %s136, %s137
    %p146 = scmp.eq.s32.totalorder %s17, 0
    %p147 = por %p145, %p146
    %p148 = scmp.ne.s32.totalorder %s136, %s137
    %p149 = scmp.eq.s32.totalorder %s18, 3
    %p150 = por %p148, %p149
    %p152 = scmp.ne.s32.totalorder %s137, %s151
    %p153 = scmp.eq.s32.totalorder %s18, 0
    %p154 = por %p152, %p153
    %s156 = sadd.s32 %s155, 1
    %p159 = scmp.eq.s32.totalorder %s12, 3
    %p160 = scmp.ne.s32.totalorder %s155, %s157
    %p161 = scmp.eq.s32.totalorder %s12, 0
    %p162 = por %p160, %p161
    %p163 = scmp.ne.s32.totalorder %s155, %s157
    %p164 = scmp.eq.s32.totalorder %s17, 3
    %p165 = por %p163, %p164
    %p166 = scmp.ne.s32.totalorder %s157, %s158
    %p167 = scmp.eq.s32.totalorder %s17, 0
    %p168 = por %p166, %p167
    %p169 = scmp.ne.s32.totalorder %s157, %s158
    %p170 = scmp.eq.s32.totalorder %s18, 3
    %p171 = por %p169, %p170
    %p173 = scmp.ne.s32.totalorder %s158, %s172
    %p174 = scmp.eq.s32.totalorder %s18, 0
    %p175 = por %p173, %p174
    %s177 = sadd.s32 %s176, 1
    %p180 = scmp.eq.s32.totalorder %s12, 3
    %p181 = scmp.ne.s32.totalorder %s176, %s178
    %p182 = scmp.eq.s32.totalorder %s12, 0
    %p183 = por %p181, %p182
    %p184 = scmp.ne.s32.totalorder %s176, %s178
    %p185 = scmp.eq.s32.totalorder %s17, 3
    %p186 = por %p184, %p185
    %p187 = scmp.ne.s32.totalorder %s178, %s179
    %p188 = scmp.eq.s32.totalorder %s17, 0
    %p189 = por %p187, %p188
    %p190 = scmp.ne.s32.totalorder %s178, %s179
    %p191 = scmp.eq.s32.totalorder %s18, 3
    %p192 = por %p190, %p191
    %p194 = scmp.ne.s32.totalorder %s179, %s193
    %p195 = scmp.eq.s32.totalorder %s18, 0
    %p196 = por %p194, %p195
    %s197 = ssub.s32 %s19, %s31
    %p198 = scmp.eq.s32.totalorder %s197, 0
    %s200 = sadd.s32 %s199, 1
    %s201 = scalar_select %p198, %s199, %s200
    %p204 = pneg %p198
    %p205 = scmp.eq.s32.totalorder %s12, 3
    %p206 = por %p204, %p205
    %p207 = scmp.ne.s32.totalorder %s199, %s202
    %p208 = scmp.eq.s32.totalorder %s12, 0
    %p209 = por %p207, %p208
    %p210 = scmp.ne.s32.totalorder %s199, %s202
    %p211 = scmp.eq.s32.totalorder %s17, 3
    %p212 = por %p210, %p211
    %p213 = scmp.ne.s32.totalorder %s202, %s203
    %p214 = scmp.eq.s32.totalorder %s17, 0
    %p215 = por %p213, %p214
    %p216 = scmp.ne.s32.totalorder %s202, %s203
    %p217 = scmp.eq.s32.totalorder %s18, 3
    %p218 = por %p216, %p217
    %p220 = scmp.ne.s32.totalorder %s203, %s219
    %p221 = scmp.eq.s32.totalorder %s18, 0
    %p222 = por %p220, %p221
    %p223 = scmp.le.s32.totalorder 1, %s12
    %p224 = scmp.lt.s32.totalorder %s12, 5
    %p225 = pnand %p223, %p224
    %p226 = pneg %p225
    // Predicated region
    $region9: #{evidential_forward.1} parent=5 // pred_check
      _
    $region10: #{evidential_forward.1} parent=5 // pred_check_branch
      %228 = sbr.rel (%p225) target = $region12
    $region11: #{evidential_forward.1} parent=5 // pred_region
      %s229 = ssub.s32 %s12, 1
      // Predicated region
      $region13: #{evidential_forward.1} parent=11 // pred_check
        %p230 = pneg %p147
      $region14: #{evidential_forward.1} parent=11 // pred_check_branch
        %232 = sbr.rel (%p230) target = $region16
      $region15: #{evidential_forward.1} parent=11 // pred_region
        _
      $region16: #{evidential_forward.1} parent=11 // pred_fallthru
        _
      // Predicated region
      $region17: #{evidential_forward.1} parent=11 // pred_check
        %p233 = pneg %p168
      $region18: #{evidential_forward.1} parent=11 // pred_check_branch
        %235 = sbr.rel (%p233) target = $region20
      $region19: #{evidential_forward.1} parent=11 // pred_region
        _
      $region20: #{evidential_forward.1} parent=11 // pred_fallthru
        _
      // Predicated region
      $region21: #{evidential_forward.1} parent=11 // pred_check
        %p236 = pneg %p189
      $region22: #{evidential_forward.1} parent=11 // pred_check_branch
        %238 = sbr.rel (%p236) target = $region24
      $region23: #{evidential_forward.1} parent=11 // pred_region
        _
      $region24: #{evidential_forward.1} parent=11 // pred_fallthru
        _
    $region12: #{evidential_forward.1} parent=5 // pred_fallthru
      _
    %p239 = scmp.lt.s32.totalorder %s12, 4
    // Predicated region
    $region25: #{evidential_forward.1} parent=5 // pred_check
      %p240 = pneg %p239
    $region26: #{evidential_forward.1} parent=5 // pred_check_branch
      %242 = sbr.rel (%p240) target = $region28
    $region27: #{evidential_forward.1} parent=5 // pred_region
      // Predicated region
      $region29: #{evidential_forward.1} parent=27 // pred_check
        %p243 = pneg %p52
      $region30: #{evidential_forward.1} parent=27 // pred_check_branch
        %245 = sbr.rel (%p243) target = $region32
      $region31: #{evidential_forward.1} parent=27 // pred_region
        %s246 = smul.u32 %s19, 2
        %s247 = sadd.s32 %s246, %s20
        %p248 = scmp.lt.s32.totalorder %s247, 2
        %s249 = scalar_select %p248, %s247, 2
        %s250 = smul.u32 4, %s249
        %s251 = ssub.s32 10, %s250
        %p252 = scmp.lt.s32.totalorder %s251, 4
        %s253 = scalar_select %p252, %s251, 4
        %s254 = smul.u32 16, %s253
        %p255 = scmp.lt.s32.totalorder %s250, 9
        %s256 = scalar_select %p255, %s250, 9
        %s257 = scalar_lea.vmem %s0, %s256
        %s258 = smul.u32 %s19, 2
        %s259 = sadd.s32 %s258, %s20
        %p260 = scmp.lt.s32.totalorder %s259, 2
        %s261 = scalar_select %p260, %s259, 2
        %s262 = smul.u32 4, %s261
        %s263 = ssub.s32 10, %s262
        %p264 = scmp.lt.s32.totalorder %s263, 4
        %s265 = scalar_select %p264, %s263, 4
        %s266 = smul.u32 16, %s265
      $region32: #{evidential_forward.1} parent=27 // pred_fallthru
        _
      // Predicated region
      $region33: #{evidential_forward.1} parent=27 // pred_check
        %p267 = pneg %p86
      $region34: #{evidential_forward.1} parent=27 // pred_check_branch
        %269 = sbr.rel (%p267) target = $region36
      $region35: #{evidential_forward.1} parent=27 // pred_region
        %s270 = smul.u32 %s19, 2
        %s271 = sadd.s32 %s270, %s20
        %p272 = scmp.lt.s32.totalorder %s271, 2
        %s273 = scalar_select %p272, %s271, 2
        %s274 = smul.u32 4, %s273
        %s275 = ssub.s32 10, %s274
        %p276 = scmp.lt.s32.totalorder %s275, 4
        %s277 = scalar_select %p276, %s275, 4
        %s278 = smul.u32 16, %s277
        %p279 = scmp.lt.s32.totalorder %s274, 9
        %s280 = scalar_select %p279, %s274, 9
        %s281 = scalar_lea.vmem %s1, %s280
        %s282 = smul.u32 %s19, 2
        %s283 = sadd.s32 %s282, %s20
        %p284 = scmp.lt.s32.totalorder %s283, 2
        %s285 = scalar_select %p284, %s283, 2
        %s286 = smul.u32 4, %s285
        %s287 = ssub.s32 10, %s286
        %p288 = scmp.lt.s32.totalorder %s287, 4
        %s289 = scalar_select %p288, %s287, 4
        %s290 = smul.u32 16, %s289
      $region36: #{evidential_forward.1} parent=27 // pred_fallthru
        _
      // Predicated region
      $region37: #{evidential_forward.1} parent=27 // pred_check
        %p291 = pneg %p120
      $region38: #{evidential_forward.1} parent=27 // pred_check_branch
        %293 = sbr.rel (%p291) target = $region40
      $region39: #{evidential_forward.1} parent=27 // pred_region
        %s294 = smul.u32 %s19, 2
        %s295 = sadd.s32 %s294, %s20
        %p296 = scmp.lt.s32.totalorder %s295, 2
        %s297 = scalar_select %p296, %s295, 2
        %s298 = smul.u32 64, %s297
        %s299 = ssub.s32 150, %s298
        %p300 = scmp.lt.s32.totalorder %s299, 64
        %s301 = scalar_select %p300, %s299, 64
        %s302 = smul.u32 128, %s301
        %p303 = scmp.lt.s32.totalorder %s298, 149
        %s304 = scalar_select %p303, %s298, 149
        %s305 = smul.addr %s304, 8
        %s306 = scalar_lea.vmem %s2, %s305
        %s307 = smul.u32 %s19, 2
        %s308 = sadd.s32 %s307, %s20
        %p309 = scmp.lt.s32.totalorder %s308, 2
        %s310 = scalar_select %p309, %s308, 2
        %s311 = smul.u32 64, %s310
        %s312 = ssub.s32 150, %s311
        %p313 = scmp.lt.s32.totalorder %s312, 64
        %s314 = scalar_select %p313, %s312, 64
        %s315 = smul.u32 128, %s314
      $region40: #{evidential_forward.1} parent=27 // pred_fallthru
        _
    $region28: #{evidential_forward.1} parent=5 // pred_fallthru
      _
    %p316 = scmp.le.s32.totalorder 1, %s12
    %p317 = scmp.lt.s32.totalorder %s12, 5
    %p318 = pnand %p316, %p317
    %p319 = pneg %p318
    // Predicated region
    $region41: #{evidential_forward.1} parent=5 // pred_check
      _
    $region42: #{evidential_forward.1} parent=5 // pred_check_branch
      %321 = sbr.rel (%p318) target = $region44
    $region43: #{evidential_forward.1} parent=5 // pred_region
      %s322 = ssub.s32 %s12, 1
      %s323 = smul.u32 %s21, 2
      %s324 = sadd.s32 %s323, %s22
      %p325 = scmp.lt.s32.totalorder %s324, 2
      %s326 = scalar_select %p325, %s324, 2
      %s327 = smul.u32 4, %s326
      %s328 = ssub.s32 10, %s327
      %p329 = scmp.lt.s32.totalorder %s328, 4
      %s330 = scalar_select %p329, %s328, 4
      %s331 = smul.u32 16, %s330
      %p332 = scmp.lt.s32.totalorder %s327, 9
      %s333 = scalar_select %p332, %s327, 9
      %s334 = scalar_lea.vmem %s0, %s333
      %p335 = pneg %p58
      %p336 = pneg %p55
      %s337 = smul.u32 %s21, 2
      %s338 = sadd.s32 %s337, %s22
      %p339 = scmp.lt.s32.totalorder %s338, 2
      %s340 = scalar_select %p339, %s338, 2
      %s341 = smul.u32 4, %s340
      %s342 = ssub.s32 10, %s341
      %p343 = scmp.lt.s32.totalorder %s342, 4
      %s344 = scalar_select %p343, %s342, 4
      %s345 = smul.u32 16, %s344
      %p346 = scmp.lt.s32.totalorder %s341, 9
      %s347 = scalar_select %p346, %s341, 9
      %s348 = scalar_lea.vmem %s1, %s347
      %p349 = pneg %p92
      %p350 = pneg %p89
      %s351 = smul.u32 %s21, 2
      %s352 = sadd.s32 %s351, %s22
      %p353 = scmp.lt.s32.totalorder %s352, 2
      %s354 = scalar_select %p353, %s352, 2
      %s355 = smul.u32 64, %s354
      %s356 = ssub.s32 150, %s355
      %p357 = scmp.lt.s32.totalorder %s356, 64
      %s358 = scalar_select %p357, %s356, 64
      %s359 = smul.u32 128, %s358
      %p360 = scmp.lt.s32.totalorder %s355, 149
      %s361 = scalar_select %p360, %s355, 149
      %s362 = smul.addr %s361, 8
      %s363 = scalar_lea.vmem %s2, %s362
      %p364 = pneg %p126
      %p365 = pneg %p123
      %p366 = pneg %p147
      %p367 = pneg %p144
      %p368 = pneg %p168
      %p369 = pneg %p165
      %p370 = pneg %p189
      %p371 = pneg %p186
      %p372 = pneg %p215
      %p373 = pneg %p212
      %p374 = scmp.lt.s32.totalorder %s21, 1
      %s375 = scalar_select %p374, %s21, 1
      %s376 = smul.addr %s375, 8
      %s377 = scalar_lea.vmem %s6, %s376
      %s378 = smul.u32 %s21, 2
      %s379 = sadd.s32 %s378, %s22
      %p380 = scmp.lt.s32.totalorder %s379, 2
      %s381 = scalar_select %p380, %s379, 2
      %s382 = smul.u32 4, %s381
      %s383 = ssub.s32 10, %s382
      %p384 = scmp.lt.s32.totalorder %s383, 4
      %s385 = scalar_select %p384, %s383, 4
      %s386 = smul.u32 16, %s385
      %p387 = scmp.lt.s32.totalorder %s382, 9
      %s388 = scalar_select %p387, %s382, 9
      %s389 = scalar_lea.vmem %s0, %s388
      %s390 = smul.u32 %s21, 2
      %s391 = sadd.s32 %s390, %s22
      %p392 = scmp.lt.s32.totalorder %s391, 2
      %s393 = scalar_select %p392, %s391, 2
      %s394 = smul.u32 4, %s393
      %s395 = ssub.s32 10, %s394
      %p396 = scmp.lt.s32.totalorder %s395, 4
      %s397 = scalar_select %p396, %s395, 4
      %s398 = smul.u32 16, %s397
      %s399 = smul.u32 %s21, 2
      %s400 = sadd.s32 %s399, %s22
      %p401 = scmp.lt.s32.totalorder %s400, 2
      %s402 = scalar_select %p401, %s400, 2
      %s403 = smul.u32 4, %s402
      %s404 = ssub.s32 10, %s403
      %p405 = scmp.lt.s32.totalorder %s404, 4
      %s406 = scalar_select %p405, %s404, 4
      %s407 = smul.u32 16, %s406
      %p408 = scmp.lt.s32.totalorder %s403, 9
      %s409 = scalar_select %p408, %s403, 9
      %s410 = scalar_lea.vmem %s1, %s409
      %s411 = smul.u32 %s21, 2
      %s412 = sadd.s32 %s411, %s22
      %p413 = scmp.lt.s32.totalorder %s412, 2
      %s414 = scalar_select %p413, %s412, 2
      %s415 = smul.u32 4, %s414
      %s416 = ssub.s32 10, %s415
      %p417 = scmp.lt.s32.totalorder %s416, 4
      %s418 = scalar_select %p417, %s416, 4
      %s419 = smul.u32 16, %s418
      %s420 = smul.u32 %s21, 2
      %s421 = sadd.s32 %s420, %s22
      %p422 = scmp.lt.s32.totalorder %s421, 2
      %s423 = scalar_select %p422, %s421, 2
      %s424 = smul.u32 64, %s423
      %s425 = ssub.s32 150, %s424
      %p426 = scmp.lt.s32.totalorder %s425, 64
      %s427 = scalar_select %p426, %s425, 64
      %s428 = smul.u32 128, %s427
      %p429 = scmp.lt.s32.totalorder %s424, 149
      %s430 = scalar_select %p429, %s424, 149
      %s431 = smul.addr %s430, 8
      %s432 = scalar_lea.vmem %s2, %s431
      %s433 = smul.u32 %s21, 2
      %s434 = sadd.s32 %s433, %s22
      %p435 = scmp.lt.s32.totalorder %s434, 2
      %s436 = scalar_select %p435, %s434, 2
      %s437 = smul.u32 64, %s436
      %s438 = ssub.s32 150, %s437
      %p439 = scmp.lt.s32.totalorder %s438, 64
      %s440 = scalar_select %p439, %s438, 64
      %s441 = smul.u32 128, %s440
      %p442 = scmp.lt.s32.totalorder %s21, 1
      %s443 = scalar_select %p442, %s21, 1
      %s444 = smul.addr %s443, 8
      %s445 = scalar_lea.vmem %s6, %s444
      %s446 = smul.u32 %s21, 2
      %s447 = sadd.s32 %s446, %s22
      %p448 = scmp.eq.s32.totalorder %s22, 0
      // Predicated region
      $region45: #{evidential_forward.1} parent=43 // pred_check
        %p449 = pneg %p448
      $region46: #{evidential_forward.1} parent=43 // pred_check_branch
        %451 = sbr.rel (%p449) target = $region48
      $region47: #{evidential_forward.1} parent=43 // pred_region
        %452 = vst [vmem:[%s445] sm:$0xff] 0.0
      $region48: #{evidential_forward.1} parent=43 // pred_fallthru
        _
      %v453 = vld [vmem:[%s389] sm:$0xf]
      %v454 = vlaneseq
      %v455 = vshrl.u32 %v454, 7
      %v456 = vadd.s32 %v455, 8
      %v457 = vlaneseq
      %v458 = vshrl.u32 %v457, 7
      %v459 = vsub.s32 0, %v458
      %v460 = vrot.slane %v453, %v459
      %v461 = vlaneseq
      %v462 = vshrl.u32 %v461, 7
      %v463 = vsub.s32 1, %v462
      %v464 = vrot.slane %v453, %v463
      %v465 = vlaneseq
      %v466 = vshrl.u32 %v465, 7
      %v467 = vsub.s32 2, %v466
      %v468 = vrot.slane %v453, %v467
      %v469 = vlaneseq
      %v470 = vshrl.u32 %v469, 7
      %v471 = vsub.s32 3, %v470
      %v472 = vrot.slane %v453, %v471
      %vm473 = vcmp.eq.s32.totalorder %v455, %v460
      %vm474 = vcmp.eq.s32.totalorder %v455, %v464
      %vm475 = vcmp.eq.s32.totalorder %v455, %v468
      %vm476 = vcmp.eq.s32.totalorder %v455, %v472
      %vm477 = vcmp.eq.s32.totalorder %v456, %v460
      %vm478 = vcmp.eq.s32.totalorder %v456, %v464
      %vm479 = vcmp.eq.s32.totalorder %v456, %v468
      %vm480 = vcmp.eq.s32.totalorder %v456, %v472
      %v481 = vsel %vm473, 1, 0
      %v482 = vsel %vm474, 1, 0
      %v483 = vsel %vm475, 1, 0
      %v484 = vsel %vm476, 1, 0
      %v485 = vsel %vm477, 1, 0
      %v486 = vsel %vm478, 1, 0
      %v487 = vsel %vm479, 1, 0
      %v488 = vsel %vm480, 1, 0
      %v489 = vcvt.s32.f32 %v481
      %v490 = vcvt.s32.f32 %v482
      %v491 = vcvt.s32.f32 %v483
      %v492 = vcvt.s32.f32 %v484
      %v493 = vcvt.s32.f32 %v485
      %v494 = vcvt.s32.f32 %v486
      %v495 = vcvt.s32.f32 %v487
      %v496 = vcvt.s32.f32 %v488
      %v497 = vld [vmem:[%s3] sm:$0xff]
      %v498 = vld [vmem:[%s3 + $0x8] sm:$0xff]
      %v499 = vld [vmem:[%s432] sm:$0xff]
      %v500 = vld [vmem:[%s432 + $0x8] sm:$0xff]
      %v501 = vld [vmem:[%s432 + $0x10] sm:$0xff]
      %v502 = vld [vmem:[%s432 + $0x18] sm:$0xff]
      %v503 = vld [vmem:[%s432 + $0x20] sm:$0xff]
      %v504 = vld [vmem:[%s432 + $0x28] sm:$0xff]
      %v505 = vld [vmem:[%s432 + $0x30] sm:$0xff]
      %v506 = vld [vmem:[%s432 + $0x38] sm:$0xff]
      %v507 = vld [vmem:[%s432 + $0x40] sm:$0xff]
      %v508 = vld [vmem:[%s432 + $0x48] sm:$0xff]
      %v509 = vld [vmem:[%s432 + $0x50] sm:$0xff]
      %v510 = vld [vmem:[%s432 + $0x58] sm:$0xff]
      %v511 = vld [vmem:[%s432 + $0x60] sm:$0xff]
      %v512 = vld [vmem:[%s432 + $0x68] sm:$0xff]
      %v513 = vld [vmem:[%s432 + $0x70] sm:$0xff]
      %v514 = vld [vmem:[%s432 + $0x78] sm:$0xff]
      %v515 = vld [vmem:[%s432 + $0x80] sm:$0xff]
      %v516 = vld [vmem:[%s432 + $0x88] sm:$0xff]
      %v517 = vld [vmem:[%s432 + $0x90] sm:$0xff]
      %v518 = vld [vmem:[%s432 + $0x98] sm:$0xff]
      %v519 = vld [vmem:[%s432 + $0xa0] sm:$0xff]
      %v520 = vld [vmem:[%s432 + $0xa8] sm:$0xff]
      %v521 = vld [vmem:[%s432 + $0xb0] sm:$0xff]
      %v522 = vld [vmem:[%s432 + $0xb8] sm:$0xff]
      %v523 = vld [vmem:[%s432 + $0xc0] sm:$0xff]
      %v524 = vld [vmem:[%s432 + $0xc8] sm:$0xff]
      %v525 = vld [vmem:[%s432 + $0xd0] sm:$0xff]
      %v526 = vld [vmem:[%s432 + $0xd8] sm:$0xff]
      %v527 = vld [vmem:[%s432 + $0xe0] sm:$0xff]
      %v528 = vld [vmem:[%s432 + $0xe8] sm:$0xff]
      %v529 = vld [vmem:[%s432 + $0xf0] sm:$0xff]
      %v530 = vld [vmem:[%s432 + $0xf8] sm:$0xff]
      %v531 = vld [vmem:[%s432 + $0x100] sm:$0xff]
      %v532 = vld [vmem:[%s432 + $0x108] sm:$0xff]
      %v533 = vld [vmem:[%s432 + $0x110] sm:$0xff]
      %v534 = vld [vmem:[%s432 + $0x118] sm:$0xff]
      %v535 = vld [vmem:[%s432 + $0x120] sm:$0xff]
      %v536 = vld [vmem:[%s432 + $0x128] sm:$0xff]
      %v537 = vld [vmem:[%s432 + $0x130] sm:$0xff]
      %v538 = vld [vmem:[%s432 + $0x138] sm:$0xff]
      %v539 = vld [vmem:[%s432 + $0x140] sm:$0xff]
      %v540 = vld [vmem:[%s432 + $0x148] sm:$0xff]
      %v541 = vld [vmem:[%s432 + $0x150] sm:$0xff]
      %v542 = vld [vmem:[%s432 + $0x158] sm:$0xff]
      %v543 = vld [vmem:[%s432 + $0x160] sm:$0xff]
      %v544 = vld [vmem:[%s432 + $0x168] sm:$0xff]
      %v545 = vld [vmem:[%s432 + $0x170] sm:$0xff]
      %v546 = vld [vmem:[%s432 + $0x178] sm:$0xff]
      %v547 = vld [vmem:[%s432 + $0x180] sm:$0xff]
      %v548 = vld [vmem:[%s432 + $0x188] sm:$0xff]
      %v549 = vld [vmem:[%s432 + $0x190] sm:$0xff]
      %v550 = vld [vmem:[%s432 + $0x198] sm:$0xff]
      %v551 = vld [vmem:[%s432 + $0x1a0] sm:$0xff]
      %v552 = vld [vmem:[%s432 + $0x1a8] sm:$0xff]
      %v553 = vld [vmem:[%s432 + $0x1b0] sm:$0xff]
      %v554 = vld [vmem:[%s432 + $0x1b8] sm:$0xff]
      %v555 = vld [vmem:[%s432 + $0x1c0] sm:$0xff]
      %v556 = vld [vmem:[%s432 + $0x1c8] sm:$0xff]
      %v557 = vld [vmem:[%s432 + $0x1d0] sm:$0xff]
      %v558 = vld [vmem:[%s432 + $0x1d8] sm:$0xff]
      %v559 = vld [vmem:[%s432 + $0x1e0] sm:$0xff]
      %v560 = vld [vmem:[%s432 + $0x1e8] sm:$0xff]
      %v561 = vld [vmem:[%s432 + $0x1f0] sm:$0xff]
      %v562 = vld [vmem:[%s432 + $0x1f8] sm:$0xff]
      %v563 = vld [vmem:[%s4] sm:$0x7]
      %vm564 = vcmask 23552
      %v566 = vsel %vm564, %v499, 0
      %v569 = vsel %vm564, %v500, 0
      %v572 = vsel %vm564, %v501, 0
      %v575 = vsel %vm564, %v502, 0
      %v578 = vsel %vm564, %v503, 0
      %v581 = vsel %vm564, %v504, 0
      %v584 = vsel %vm564, %v505, 0
      %v587 = vsel %vm564, %v506, 0
      %v590 = vsel %vm564, %v507, 0
      %v593 = vsel %vm564, %v508, 0
      %v596 = vsel %vm564, %v509, 0
      %v599 = vsel %vm564, %v510, 0
      %v602 = vsel %vm564, %v511, 0
      %v605 = vsel %vm564, %v512, 0
      %v608 = vsel %vm564, %v513, 0
      %v611 = vsel %vm564, %v514, 0
      %v614 = vsel %vm564, %v515, 0
      %v617 = vsel %vm564, %v516, 0
      %v620 = vsel %vm564, %v517, 0
      %v623 = vsel %vm564, %v518, 0
      %v626 = vsel %vm564, %v519, 0
      %v629 = vsel %vm564, %v520, 0
      %v632 = vsel %vm564, %v521, 0
      %v635 = vsel %vm564, %v522, 0
      %v638 = vsel %vm564, %v523, 0
      %v641 = vsel %vm564, %v524, 0
      %v644 = vsel %vm564, %v525, 0
      %v647 = vsel %vm564, %v526, 0
      %v650 = vsel %vm564, %v527, 0
      %v653 = vsel %vm564, %v528, 0
      %v656 = vsel %vm564, %v529, 0
      %v659 = vsel %vm564, %v530, 0
      %v662 = vsel %vm564, %v531, 0
      %v665 = vsel %vm564, %v532, 0
      %v668 = vsel %vm564, %v533, 0
      %v671 = vsel %vm564, %v534, 0
      %v674 = vsel %vm564, %v535, 0
      %v677 = vsel %vm564, %v536, 0
      %v680 = vsel %vm564, %v537, 0
      %v683 = vsel %vm564, %v538, 0
      %v686 = vsel %vm564, %v539, 0
      %v689 = vsel %vm564, %v540, 0
      %v692 = vsel %vm564, %v541, 0
      %v695 = vsel %vm564, %v542, 0
      %v698 = vsel %vm564, %v543, 0
      %v701 = vsel %vm564, %v544, 0
      %v704 = vsel %vm564, %v545, 0
      %v707 = vsel %vm564, %v546, 0
      %v710 = vsel %vm564, %v547, 0
      %v713 = vsel %vm564, %v548, 0
      %v716 = vsel %vm564, %v549, 0
      %v719 = vsel %vm564, %v550, 0
      %v722 = vsel %vm564, %v551, 0
      %v725 = vsel %vm564, %v552, 0
      %v728 = vsel %vm564, %v553, 0
      %v731 = vsel %vm564, %v554, 0
      %v734 = vsel %vm564, %v555, 0
      %v737 = vsel %vm564, %v556, 0
      %v740 = vsel %vm564, %v557, 0
      %v743 = vsel %vm564, %v558, 0
      %v746 = vsel %vm564, %v559, 0
      %v749 = vsel %vm564, %v560, 0
      %v752 = vsel %vm564, %v561, 0
      %v755 = vsel %vm564, %v562, 0
      %vm757 = vcmask 1042432
      %v759 = vsel %vm757, %v563, 0
      %761 = vmatprep.subr.mxu0 0.0
      %762 = vmatpush1.msra.mxu0 %v759
      %763 = vmatprep.subr.mxu0 0.0
      %764 = vmatpush1.msra.mxu0 0.0
      %765 = vmatprep.subr.mxu0 0.0
      %766 = vmatpush1.msra.mxu0 0.0
      %767 = vmatprep.subr.mxu0 0.0
      %768 = vmatpush1.msra.mxu0 0.0
      %769 = vmatprep.subr.mxu0 0.0
      %770 = vmatpush1.msra.mxu0 0.0
      %771 = vmatprep.subr.mxu0 0.0
      %772 = vmatpush1.msra.mxu0 0.0
      %773 = vmatprep.subr.mxu0 0.0
      %774 = vmatpush1.msra.mxu0 0.0
      %775 = vmatprep.subr.mxu0 0.0
      %776 = vmatpush1.msra.mxu0 0.0
      %777 = vmatprep.subr.mxu0 0.0
      %778 = vmatpush1.msra.mxu0 0.0
      %779 = vmatprep.subr.mxu0 0.0
      %780 = vmatpush1.msra.mxu0 0.0
      %781 = vmatprep.subr.mxu0 0.0
      %782 = vmatpush1.msra.mxu0 0.0
      %783 = vmatprep.subr.mxu0 0.0
      %784 = vmatpush1.msra.mxu0 0.0
      %785 = vmatprep.subr.mxu0 0.0
      %786 = vmatpush1.msra.mxu0 0.0
      %787 = vmatprep.subr.mxu0 0.0
      %788 = vmatpush1.msra.mxu0 0.0
      %789 = vmatprep.subr.mxu0 0.0
      %790 = vmatpush1.msra.mxu0 0.0
      %791 = vmatprep.subr.mxu0 0.0
      %792 = vmatpush1.msra.mxu0 0.0
      %793 = vmatprep.subr.mxu0 0.0
      %794 = vmatpush1.msra.mxu0 0.0
      %795 = vmatprep.subr.mxu0 0.0
      %796 = vmatpush1.msra.mxu0 0.0
      %797 = vmatprep.subr.mxu0 0.0
      %798 = vmatpush1.msra.mxu0 0.0
      %799 = vmatprep.subr.mxu0 0.0
      %800 = vmatpush1.msra.mxu0 0.0
      %801 = vmatprep.subr.mxu0 0.0
      %802 = vmatpush1.msra.mxu0 0.0
      %803 = vmatprep.subr.mxu0 0.0
      %804 = vmatpush1.msra.mxu0 0.0
      %805 = vmatprep.subr.mxu0 0.0
      %806 = vmatpush1.msra.mxu0 0.0
      %807 = vmatprep.subr.mxu0 0.0
      %808 = vmatpush1.msra.mxu0 0.0
      %809 = vmatprep.subr.mxu0 0.0
      %810 = vmatpush1.msra.mxu0 0.0
      %811 = vmatprep.subr.mxu0 0.0
      %812 = vmatpush1.msra.mxu0 0.0
      %813 = vmatprep.subr.mxu0 0.0
      %814 = vmatpush1.msra.mxu0 0.0
      %815 = vmatprep.subr.mxu0 0.0
      %816 = vmatpush1.msra.mxu0 0.0
      %817 = vmatprep.subr.mxu0 0.0
      %818 = vmatpush1.msra.mxu0 0.0
      %819 = vmatprep.subr.mxu0 0.0
      %820 = vmatpush1.msra.mxu0 0.0
      %821 = vmatprep.subr.mxu0 0.0
      %822 = vmatpush1.msra.mxu0 0.0
      %823 = vmatprep.subr.mxu0 0.0
      %824 = vmatpush1.msra.mxu0 0.0
      %825 = vmatprep.mubr.f32.mxu0 0.0
      %826 = vmatmul.mubr.f32.gmra.mrb[0].mxu0 %v566
      %v827 = vpop.f32.mrb[0].mxu0
      %v828 = vadd.f32 0.0, %v827
      %v829 = vpop.f32.mrb[0].mxu0
      %830 = vmatprep.mubr.f32.mxu0 0.0
      %831 = vmatmul.mubr.f32.gmra.mrb[0].mxu0 %v569
      %v832 = vpop.f32.mrb[0].mxu0
      %v833 = vadd.f32 0.0, %v832
      %v834 = vpop.f32.mrb[0].mxu0
      %835 = vmatprep.mubr.f32.mxu0 0.0
      %836 = vmatmul.mubr.f32.gmra.mrb[0].mxu0 %v572
      %v837 = vpop.f32.mrb[0].mxu0
      %v838 = vadd.f32 0.0, %v837
      %v839 = vpop.f32.mrb[0].mxu0
      %840 = vmatprep.mubr.f32.mxu0 0.0
      %841 = vmatmul.mubr.f32.gmra.mrb[0].mxu0 %v575
      %v842 = vpop.f32.mrb[0].mxu0
      %v843 = vadd.f32 0.0, %v842
      %v844 = vpop.f32.mrb[0].mxu0
      %845 = vmatprep.mubr.f32.mxu0 0.0
      %846 = vmatmul.mubr.f32.gmra.mrb[0].mxu0 %v578
      %v847 = vpop.f32.mrb[0].mxu0
      %v848 = vadd.f32 0.0, %v847
      %v849 = vpop.f32.mrb[0].mxu0
      %850 = vmatprep.mubr.f32.mxu0 0.0
      %851 = vmatmul.mubr.f32.gmra.mrb[0].mxu0 %v581
      %v852 = vpop.f32.mrb[0].mxu0
      %v853 = vadd.f32 0.0, %v852
      %v854 = vpop.f32.mrb[0].mxu0
      %855 = vmatprep.mubr.f32.mxu0 0.0
      %856 = vmatmul.mubr.f32.gmra.mrb[0].mxu0 %v584
      %v857 = vpop.f32.mrb[0].mxu0
      %v858 = vadd.f32 0.0, %v857
      %v859 = vpop.f32.mrb[0].mxu0
      %860 = vmatprep.mubr.f32.mxu0 0.0
      %861 = vmatmul.mubr.f32.gmra.mrb[0].mxu0 %v587
      %v862 = vpop.f32.mrb[0].mxu0
      %v863 = vadd.f32 0.0, %v862
      %v864 = vpop.f32.mrb[0].mxu0
      %865 = vmatprep.mubr.f32.mxu0 0.0
      %866 = vmatmul.mubr.f32.gmra.mrb[0].mxu0 %v590
      %v867 = vpop.f32.mrb[0].mxu0
      %v868 = vadd.f32 0.0, %v867
      %v869 = vpop.f32.mrb[0].mxu0
      %870 = vmatprep.mubr.f32.mxu0 0.0
      %871 = vmatmul.mubr.f32.gmra.mrb[0].mxu0 %v593
      %v872 = vpop.f32.mrb[0].mxu0
      %v873 = vadd.f32 0.0, %v872
      %v874 = vpop.f32.mrb[0].mxu0
      %875 = vmatprep.mubr.f32.mxu0 0.0
      %876 = vmatmul.mubr.f32.gmra.mrb[0].mxu0 %v596
      %v877 = vpop.f32.mrb[0].mxu0
      %v878 = vadd.f32 0.0, %v877
      %v879 = vpop.f32.mrb[0].mxu0
      %880 = vmatprep.mubr.f32.mxu0 0.0
      %881 = vmatmul.mubr.f32.gmra.mrb[0].mxu0 %v599
      %v882 = vpop.f32.mrb[0].mxu0
      %v883 = vadd.f32 0.0, %v882
      %v884 = vpop.f32.mrb[0].mxu0
      %885 = vmatprep.mubr.f32.mxu0 0.0
      %886 = vmatmul.mubr.f32.gmra.mrb[0].mxu0 %v602
      %v887 = vpop.f32.mrb[0].mxu0
      %v888 = vadd.f32 0.0, %v887
      %v889 = vpop.f32.mrb[0].mxu0
      %890 = vmatprep.mubr.f32.mxu0 0.0
      %891 = vmatmul.mubr.f32.gmra.mrb[0].mxu0 %v605
      %v892 = vpop.f32.mrb[0].mxu0
      %v893 = vadd.f32 0.0, %v892
      %v894 = vpop.f32.mrb[0].mxu0
      %895 = vmatprep.mubr.f32.mxu0 0.0
      %896 = vmatmul.mubr.f32.gmra.mrb[0].mxu0 %v608
      %v897 = vpop.f32.mrb[0].mxu0
      %v898 = vadd.f32 0.0, %v897
      %v899 = vpop.f32.mrb[0].mxu0
      %900 = vmatprep.mubr.f32.mxu0 0.0
      %901 = vmatmul.mubr.f32.gmra.mrb[0].mxu0 %v611
      %v902 = vpop.f32.mrb[0].mxu0
      %v903 = vadd.f32 0.0, %v902
      %v904 = vpop.f32.mrb[0].mxu0
      %905 = vmatprep.mubr.f32.mxu0 0.0
      %906 = vmatmul.mubr.f32.gmra.mrb[0].mxu0 %v614
      %v907 = vpop.f32.mrb[0].mxu0
      %v908 = vadd.f32 0.0, %v907
      %v909 = vpop.f32.mrb[0].mxu0
      %910 = vmatprep.mubr.f32.mxu0 0.0
      %911 = vmatmul.mubr.f32.gmra.mrb[0].mxu0 %v617
      %v912 = vpop.f32.mrb[0].mxu0
      %v913 = vadd.f32 0.0, %v912
      %v914 = vpop.f32.mrb[0].mxu0
      %915 = vmatprep.mubr.f32.mxu0 0.0
      %916 = vmatmul.mubr.f32.gmra.mrb[0].mxu0 %v620
      %v917 = vpop.f32.mrb[0].mxu0
      %v918 = vadd.f32 0.0, %v917
      %v919 = vpop.f32.mrb[0].mxu0
      %920 = vmatprep.mubr.f32.mxu0 0.0
      %921 = vmatmul.mubr.f32.gmra.mrb[0].mxu0 %v623
      %v922 = vpop.f32.mrb[0].mxu0
      %v923 = vadd.f32 0.0, %v922
      %v924 = vpop.f32.mrb[0].mxu0
      %925 = vmatprep.mubr.f32.mxu0 0.0
      %926 = vmatmul.mubr.f32.gmra.mrb[0].mxu0 %v626
      %v927 = vpop.f32.mrb[0].mxu0
      %v928 = vadd.f32 0.0, %v927
      %v929 = vpop.f32.mrb[0].mxu0
      %930 = vmatprep.mubr.f32.mxu0 0.0
      %931 = vmatmul.mubr.f32.gmra.mrb[0].mxu0 %v629
      %v932 = vpop.f32.mrb[0].mxu0
      %v933 = vadd.f32 0.0, %v932
      %v934 = vpop.f32.mrb[0].mxu0
      %935 = vmatprep.mubr.f32.mxu0 0.0
      %936 = vmatmul.mubr.f32.gmra.mrb[0].mxu0 %v632
      %v937 = vpop.f32.mrb[0].mxu0
      %v938 = vadd.f32 0.0, %v937
      %v939 = vpop.f32.mrb[0].mxu0
      %940 = vmatprep.mubr.f32.mxu0 0.0
      %941 = vmatmul.mubr.f32.gmra.mrb[0].mxu0 %v635
      %v942 = vpop.f32.mrb[0].mxu0
      %v943 = vadd.f32 0.0, %v942
      %v944 = vpop.f32.mrb[0].mxu0
      %945 = vmatprep.mubr.f32.mxu0 0.0
      %946 = vmatmul.mubr.f32.gmra.mrb[0].mxu0 %v638
      %v947 = vpop.f32.mrb[0].mxu0
      %v948 = vadd.f32 0.0, %v947
      %v949 = vpop.f32.mrb[0].mxu0
      %950 = vmatprep.mubr.f32.mxu0 0.0
      %951 = vmatmul.mubr.f32.gmra.mrb[0].mxu0 %v641
      %v952 = vpop.f32.mrb[0].mxu0
      %v953 = vadd.f32 0.0, %v952
      %v954 = vpop.f32.mrb[0].mxu0
      %955 = vmatprep.mubr.f32.mxu0 0.0
      %956 = vmatmul.mubr.f32.gmra.mrb[0].mxu0 %v644
      %v957 = vpop.f32.mrb[0].mxu0
      %v958 = vadd.f32 0.0, %v957
      %v959 = vpop.f32.mrb[0].mxu0
      %960 = vmatprep.mubr.f32.mxu0 0.0
      %961 = vmatmul.mubr.f32.gmra.mrb[0].mxu0 %v647
      %v962 = vpop.f32.mrb[0].mxu0
      %v963 = vadd.f32 0.0, %v962
      %v964 = vpop.f32.mrb[0].mxu0
      %965 = vmatprep.mubr.f32.mxu0 0.0
      %966 = vmatmul.mubr.f32.gmra.mrb[0].mxu0 %v650
      %v967 = vpop.f32.mrb[0].mxu0
      %v968 = vadd.f32 0.0, %v967
      %v969 = vpop.f32.mrb[0].mxu0
      %970 = vmatprep.mubr.f32.mxu0 0.0
      %971 = vmatmul.mubr.f32.gmra.mrb[0].mxu0 %v653
      %v972 = vpop.f32.mrb[0].mxu0
      %v973 = vadd.f32 0.0, %v972
      %v974 = vpop.f32.mrb[0].mxu0
      %975 = vmatprep.mubr.f32.mxu0 0.0
      %976 = vmatmul.mubr.f32.gmra.mrb[0].mxu0 %v656
      %v977 = vpop.f32.mrb[0].mxu0
      %v978 = vadd.f32 0.0, %v977
      %v979 = vpop.f32.mrb[0].mxu0
      %980 = vmatprep.mubr.f32.mxu0 0.0
      %981 = vmatmul.mubr.f32.gmra.mrb[0].mxu0 %v659
      %v982 = vpop.f32.mrb[0].mxu0
      %v983 = vadd.f32 0.0, %v982
      %v984 = vpop.f32.mrb[0].mxu0
      %985 = vmatprep.mubr.f32.mxu0 0.0
      %986 = vmatmul.mubr.f32.gmra.mrb[0].mxu0 %v662
      %v987 = vpop.f32.mrb[0].mxu0
      %v988 = vadd.f32 0.0, %v987
      %v989 = vpop.f32.mrb[0].mxu0
      %990 = vmatprep.mubr.f32.mxu0 0.0
      %991 = vmatmul.mubr.f32.gmra.mrb[0].mxu0 %v665
      %v992 = vpop.f32.mrb[0].mxu0
      %v993 = vadd.f32 0.0, %v992
      %v994 = vpop.f32.mrb[0].mxu0
      %995 = vmatprep.mubr.f32.mxu0 0.0
      %996 = vmatmul.mubr.f32.gmra.mrb[0].mxu0 %v668
      %v997 = vpop.f32.mrb[0].mxu0
      %v998 = vadd.f32 0.0, %v997
      %v999 = vpop.f32.mrb[0].mxu0
      %1000 = vmatprep.mubr.f32.mxu0 0.0
      %1001 = vmatmul.mubr.f32.gmra.mrb[0].mxu0 %v671
      %v1002 = vpop.f32.mrb[0].mxu0
      %v1003 = vadd.f32 0.0, %v1002
      %v1004 = vpop.f32.mrb[0].mxu0
      %1005 = vmatprep.mubr.f32.mxu0 0.0
      %1006 = vmatmul.mubr.f32.gmra.mrb[0].mxu0 %v674
      %v1007 = vpop.f32.mrb[0].mxu0
      %v1008 = vadd.f32 0.0, %v1007
      %v1009 = vpop.f32.mrb[0].mxu0
      %1010 = vmatprep.mubr.f32.mxu0 0.0
      %1011 = vmatmul.mubr.f32.gmra.mrb[0].mxu0 %v677
      %v1012 = vpop.f32.mrb[0].mxu0
      %v1013 = vadd.f32 0.0, %v1012
      %v1014 = vpop.f32.mrb[0].mxu0
      %1015 = vmatprep.mubr.f32.mxu0 0.0
      %1016 = vmatmul.mubr.f32.gmra.mrb[0].mxu0 %v680
      %v1017 = vpop.f32.mrb[0].mxu0
      %v1018 = vadd.f32 0.0, %v1017
      %v1019 = vpop.f32.mrb[0].mxu0
      %1020 = vmatprep.mubr.f32.mxu0 0.0
      %1021 = vmatmul.mubr.f32.gmra.mrb[0].mxu0 %v683
      %v1022 = vpop.f32.mrb[0].mxu0
      %v1023 = vadd.f32 0.0, %v1022
      %v1024 = vpop.f32.mrb[0].mxu0
      %1025 = vmatprep.mubr.f32.mxu0 0.0
      %1026 = vmatmul.mubr.f32.gmra.mrb[0].mxu0 %v686
      %v1027 = vpop.f32.mrb[0].mxu0
      %v1028 = vadd.f32 0.0, %v1027
      %v1029 = vpop.f32.mrb[0].mxu0
      %1030 = vmatprep.mubr.f32.mxu0 0.0
      %1031 = vmatmul.mubr.f32.gmra.mrb[0].mxu0 %v689
      %v1032 = vpop.f32.mrb[0].mxu0
      %v1033 = vadd.f32 0.0, %v1032
      %v1034 = vpop.f32.mrb[0].mxu0
      %1035 = vmatprep.mubr.f32.mxu0 0.0
      %1036 = vmatmul.mubr.f32.gmra.mrb[0].mxu0 %v692
      %v1037 = vpop.f32.mrb[0].mxu0
      %v1038 = vadd.f32 0.0, %v1037
      %v1039 = vpop.f32.mrb[0].mxu0
      %1040 = vmatprep.mubr.f32.mxu0 0.0
      %1041 = vmatmul.mubr.f32.gmra.mrb[0].mxu0 %v695
      %v1042 = vpop.f32.mrb[0].mxu0
      %v1043 = vadd.f32 0.0, %v1042
      %v1044 = vpop.f32.mrb[0].mxu0
      %1045 = vmatprep.mubr.f32.mxu0 0.0
      %1046 = vmatmul.mubr.f32.gmra.mrb[0].mxu0 %v698
      %v1047 = vpop.f32.mrb[0].mxu0
      %v1048 = vadd.f32 0.0, %v1047
      %v1049 = vpop.f32.mrb[0].mxu0
      %1050 = vmatprep.mubr.f32.mxu0 0.0
      %1051 = vmatmul.mubr.f32.gmra.mrb[0].mxu0 %v701
      %v1052 = vpop.f32.mrb[0].mxu0
      %v1053 = vadd.f32 0.0, %v1052
      %v1054 = vpop.f32.mrb[0].mxu0
      %1055 = vmatprep.mubr.f32.mxu0 0.0
      %1056 = vmatmul.mubr.f32.gmra.mrb[0].mxu0 %v704
      %v1057 = vpop.f32.mrb[0].mxu0
      %v1058 = vadd.f32 0.0, %v1057
      %v1059 = vpop.f32.mrb[0].mxu0
      %1060 = vmatprep.mubr.f32.mxu0 0.0
      %1061 = vmatmul.mubr.f32.gmra.mrb[0].mxu0 %v707
      %v1062 = vpop.f32.mrb[0].mxu0
      %v1063 = vadd.f32 0.0, %v1062
      %v1064 = vpop.f32.mrb[0].mxu0
      %1065 = vmatprep.mubr.f32.mxu0 0.0
      %1066 = vmatmul.mubr.f32.gmra.mrb[0].mxu0 %v710
      %v1067 = vpop.f32.mrb[0].mxu0
      %v1068 = vadd.f32 0.0, %v1067
      %v1069 = vpop.f32.mrb[0].mxu0
      %1070 = vmatprep.mubr.f32.mxu0 0.0
      %1071 = vmatmul.mubr.f32.gmra.mrb[0].mxu0 %v713
      %v1072 = vpop.f32.mrb[0].mxu0
      %v1073 = vadd.f32 0.0, %v1072
      %v1074 = vpop.f32.mrb[0].mxu0
      %1075 = vmatprep.mubr.f32.mxu0 0.0
      %1076 = vmatmul.mubr.f32.gmra.mrb[0].mxu0 %v716
      %v1077 = vpop.f32.mrb[0].mxu0
      %v1078 = vadd.f32 0.0, %v1077
      %v1079 = vpop.f32.mrb[0].mxu0
      %1080 = vmatprep.mubr.f32.mxu0 0.0
      %1081 = vmatmul.mubr.f32.gmra.mrb[0].mxu0 %v719
      %v1082 = vpop.f32.mrb[0].mxu0
      %v1083 = vadd.f32 0.0, %v1082
      %v1084 = vpop.f32.mrb[0].mxu0
      %1085 = vmatprep.mubr.f32.mxu0 0.0
      %1086 = vmatmul.mubr.f32.gmra.mrb[0].mxu0 %v722
      %v1087 = vpop.f32.mrb[0].mxu0
      %v1088 = vadd.f32 0.0, %v1087
      %v1089 = vpop.f32.mrb[0].mxu0
      %1090 = vmatprep.mubr.f32.mxu0 0.0
      %1091 = vmatmul.mubr.f32.gmra.mrb[0].mxu0 %v725
      %v1092 = vpop.f32.mrb[0].mxu0
      %v1093 = vadd.f32 0.0, %v1092
      %v1094 = vpop.f32.mrb[0].mxu0
      %1095 = vmatprep.mubr.f32.mxu0 0.0
      %1096 = vmatmul.mubr.f32.gmra.mrb[0].mxu0 %v728
      %v1097 = vpop.f32.mrb[0].mxu0
      %v1098 = vadd.f32 0.0, %v1097
      %v1099 = vpop.f32.mrb[0].mxu0
      %1100 = vmatprep.mubr.f32.mxu0 0.0
      %1101 = vmatmul.mubr.f32.gmra.mrb[0].mxu0 %v731
      %v1102 = vpop.f32.mrb[0].mxu0
      %v1103 = vadd.f32 0.0, %v1102
      %v1104 = vpop.f32.mrb[0].mxu0
      %1105 = vmatprep.mubr.f32.mxu0 0.0
      %1106 = vmatmul.mubr.f32.gmra.mrb[0].mxu0 %v734
      %v1107 = vpop.f32.mrb[0].mxu0
      %v1108 = vadd.f32 0.0, %v1107
      %v1109 = vpop.f32.mrb[0].mxu0
      %1110 = vmatprep.mubr.f32.mxu0 0.0
      %1111 = vmatmul.mubr.f32.gmra.mrb[0].mxu0 %v737
      %v1112 = vpop.f32.mrb[0].mxu0
      %v1113 = vadd.f32 0.0, %v1112
      %v1114 = vpop.f32.mrb[0].mxu0
      %1115 = vmatprep.mubr.f32.mxu0 0.0
      %1116 = vmatmul.mubr.f32.gmra.mrb[0].mxu0 %v740
      %v1117 = vpop.f32.mrb[0].mxu0
      %v1118 = vadd.f32 0.0, %v1117
      %v1119 = vpop.f32.mrb[0].mxu0
      %1120 = vmatprep.mubr.f32.mxu0 0.0
      %1121 = vmatmul.mubr.f32.gmra.mrb[0].mxu0 %v743
      %v1122 = vpop.f32.mrb[0].mxu0
      %v1123 = vadd.f32 0.0, %v1122
      %v1124 = vpop.f32.mrb[0].mxu0
      %1125 = vmatprep.mubr.f32.mxu0 0.0
      %1126 = vmatmul.mubr.f32.gmra.mrb[0].mxu0 %v746
      %v1127 = vpop.f32.mrb[0].mxu0
      %v1128 = vadd.f32 0.0, %v1127
      %v1129 = vpop.f32.mrb[0].mxu0
      %1130 = vmatprep.mubr.f32.mxu0 0.0
      %1131 = vmatmul.mubr.f32.gmra.mrb[0].mxu0 %v749
      %v1132 = vpop.f32.mrb[0].mxu0
      %v1133 = vadd.f32 0.0, %v1132
      %v1134 = vpop.f32.mrb[0].mxu0
      %1135 = vmatprep.mubr.f32.mxu0 0.0
      %1136 = vmatmul.mubr.f32.gmra.mrb[0].mxu0 %v752
      %v1137 = vpop.f32.mrb[0].mxu0
      %v1138 = vadd.f32 0.0, %v1137
      %v1139 = vpop.f32.mrb[0].mxu0
      %1140 = vmatprep.mubr.f32.mxu0 0.0
      %1141 = vmatmul.mubr.f32.gmra.mrb[0].mxu0 %v755
      %v1142 = vpop.f32.mrb[0].mxu0
      %v1143 = vadd.f32 0.0, %v1142
      %v1144 = vpop.f32.mrb[0].mxu0
      %1145 = vdwg.mxu0
      %1146 = vxpose.xlu0.b32.start [1/16] %v489, 128
      %1147 = vxpose.xlu0.b32.cont [2/16] %v493, 128
      %1148 = vxpose.xlu0.b32.cont [3/16] 0.0, 128
      %1149 = vxpose.xlu0.b32.cont [4/16] 0.0, 128
      %1150 = vxpose.xlu0.b32.cont [5/16] 0.0, 128
      %1151 = vxpose.xlu0.b32.cont [6/16] 0.0, 128
      %1152 = vxpose.xlu0.b32.cont [7/16] 0.0, 128
      %1153 = vxpose.xlu0.b32.cont [8/16] 0.0, 128
      %1154 = vxpose.xlu0.b32.cont [9/16] 0.0, 128
      %1155 = vxpose.xlu0.b32.cont [10/16] 0.0, 128
      %1156 = vxpose.xlu0.b32.cont [11/16] 0.0, 128
      %1157 = vxpose.xlu0.b32.cont [12/16] 0.0, 128
      %1158 = vxpose.xlu0.b32.cont [13/16] 0.0, 128
      %1159 = vxpose.xlu0.b32.cont [14/16] 0.0, 128
      %1160 = vxpose.xlu0.b32.cont [15/16] 0.0, 128
      %1161 = vxpose.xlu0.b32.end [16/16] 0.0, 128
      %v1162 = vpop.trf.xlu0
      %v1163 = vpop.trf.xlu0
      %v1164 = vpop.trf.xlu0
      %v1165 = vpop.trf.xlu0
      %v1166 = vpop.trf.xlu0
      %v1167 = vpop.trf.xlu0
      %v1168 = vpop.trf.xlu0
      %v1169 = vpop.trf.xlu0
      %v1170 = vpop.trf.xlu0
      %v1171 = vpop.trf.xlu0
      %v1172 = vpop.trf.xlu0
      %v1173 = vpop.trf.xlu0
      %v1174 = vpop.trf.xlu0
      %v1175 = vpop.trf.xlu0
      %v1176 = vpop.trf.xlu0
      %v1177 = vpop.trf.xlu0
      %1178 = vxpose.xlu0.b32.start [1/16] %v490, 128
      %1179 = vxpose.xlu0.b32.cont [2/16] %v494, 128
      %1180 = vxpose.xlu0.b32.cont [3/16] 0.0, 128
      %1181 = vxpose.xlu0.b32.cont [4/16] 0.0, 128
      %1182 = vxpose.xlu0.b32.cont [5/16] 0.0, 128
      %1183 = vxpose.xlu0.b32.cont [6/16] 0.0, 128
      %1184 = vxpose.xlu0.b32.cont [7/16] 0.0, 128
      %1185 = vxpose.xlu0.b32.cont [8/16] 0.0, 128
      %1186 = vxpose.xlu0.b32.cont [9/16] 0.0, 128
      %1187 = vxpose.xlu0.b32.cont [10/16] 0.0, 128
      %1188 = vxpose.xlu0.b32.cont [11/16] 0.0, 128
      %1189 = vxpose.xlu0.b32.cont [12/16] 0.0, 128
      %1190 = vxpose.xlu0.b32.cont [13/16] 0.0, 128
      %1191 = vxpose.xlu0.b32.cont [14/16] 0.0, 128
      %1192 = vxpose.xlu0.b32.cont [15/16] 0.0, 128
      %1193 = vxpose.xlu0.b32.end [16/16] 0.0, 128
      %v1194 = vpop.trf.xlu0
      %v1195 = vpop.trf.xlu0
      %v1196 = vpop.trf.xlu0
      %v1197 = vpop.trf.xlu0
      %v1198 = vpop.trf.xlu0
      %v1199 = vpop.trf.xlu0
      %v1200 = vpop.trf.xlu0
      %v1201 = vpop.trf.xlu0
      %v1202 = vpop.trf.xlu0
      %v1203 = vpop.trf.xlu0
      %v1204 = vpop.trf.xlu0
      %v1205 = vpop.trf.xlu0
      %v1206 = vpop.trf.xlu0
      %v1207 = vpop.trf.xlu0
      %v1208 = vpop.trf.xlu0
      %v1209 = vpop.trf.xlu0
      %1210 = vxpose.xlu0.b32.start [1/16] %v491, 128
      %1211 = vxpose.xlu0.b32.cont [2/16] %v495, 128
      %1212 = vxpose.xlu0.b32.cont [3/16] 0.0, 128
      %1213 = vxpose.xlu0.b32.cont [4/16] 0.0, 128
      %1214 = vxpose.xlu0.b32.cont [5/16] 0.0, 128
      %1215 = vxpose.xlu0.b32.cont [6/16] 0.0, 128
      %1216 = vxpose.xlu0.b32.cont [7/16] 0.0, 128
      %1217 = vxpose.xlu0.b32.cont [8/16] 0.0, 128
      %1218 = vxpose.xlu0.b32.cont [9/16] 0.0, 128
      %1219 = vxpose.xlu0.b32.cont [10/16] 0.0, 128
      %1220 = vxpose.xlu0.b32.cont [11/16] 0.0, 128
      %1221 = vxpose.xlu0.b32.cont [12/16] 0.0, 128
      %1222 = vxpose.xlu0.b32.cont [13/16] 0.0, 128
      %1223 = vxpose.xlu0.b32.cont [14/16] 0.0, 128
      %1224 = vxpose.xlu0.b32.cont [15/16] 0.0, 128
      %1225 = vxpose.xlu0.b32.end [16/16] 0.0, 128
      %v1226 = vpop.trf.xlu0
      %v1227 = vpop.trf.xlu0
      %v1228 = vpop.trf.xlu0
      %v1229 = vpop.trf.xlu0
      %v1230 = vpop.trf.xlu0
      %v1231 = vpop.trf.xlu0
      %v1232 = vpop.trf.xlu0
      %v1233 = vpop.trf.xlu0
      %v1234 = vpop.trf.xlu0
      %v1235 = vpop.trf.xlu0
      %v1236 = vpop.trf.xlu0
      %v1237 = vpop.trf.xlu0
      %v1238 = vpop.trf.xlu0
      %v1239 = vpop.trf.xlu0
      %v1240 = vpop.trf.xlu0
      %v1241 = vpop.trf.xlu0
      %1242 = vxpose.xlu0.b32.start [1/16] %v492, 128
      %1243 = vxpose.xlu0.b32.cont [2/16] %v496, 128
      %1244 = vxpose.xlu0.b32.cont [3/16] 0.0, 128
      %1245 = vxpose.xlu0.b32.cont [4/16] 0.0, 128
      %1246 = vxpose.xlu0.b32.cont [5/16] 0.0, 128
      %1247 = vxpose.xlu0.b32.cont [6/16] 0.0, 128
      %1248 = vxpose.xlu0.b32.cont [7/16] 0.0, 128
      %1249 = vxpose.xlu0.b32.cont [8/16] 0.0, 128
      %1250 = vxpose.xlu0.b32.cont [9/16] 0.0, 128
      %1251 = vxpose.xlu0.b32.cont [10/16] 0.0, 128
      %1252 = vxpose.xlu0.b32.cont [11/16] 0.0, 128
      %1253 = vxpose.xlu0.b32.cont [12/16] 0.0, 128
      %1254 = vxpose.xlu0.b32.cont [13/16] 0.0, 128
      %1255 = vxpose.xlu0.b32.cont [14/16] 0.0, 128
      %1256 = vxpose.xlu0.b32.cont [15/16] 0.0, 128
      %1257 = vxpose.xlu0.b32.end [16/16] 0.0, 128
      %v1258 = vpop.trf.xlu0
      %v1259 = vpop.trf.xlu0
      %v1260 = vpop.trf.xlu0
      %v1261 = vpop.trf.xlu0
      %v1262 = vpop.trf.xlu0
      %v1263 = vpop.trf.xlu0
      %v1264 = vpop.trf.xlu0
      %v1265 = vpop.trf.xlu0
      %v1266 = vpop.trf.xlu0
      %v1267 = vpop.trf.xlu0
      %v1268 = vpop.trf.xlu0
      %v1269 = vpop.trf.xlu0
      %v1270 = vpop.trf.xlu0
      %v1271 = vpop.trf.xlu0
      %v1272 = vpop.trf.xlu0
      %v1273 = vpop.trf.xlu0
      %vm1274 = vcmask 130048
      %v1276 = vsel %vm1274, %v1162, 0
      %v1279 = vsel %vm1274, %v1163, 0
      %v1282 = vsel %vm1274, %v1164, 0
      %v1285 = vsel %vm1274, %v1165, 0
      %v1288 = vsel %vm1274, %v1166, 0
      %v1291 = vsel %vm1274, %v1167, 0
      %v1294 = vsel %vm1274, %v1168, 0
      %v1297 = vsel %vm1274, %v1169, 0
      %v1300 = vsel %vm1274, %v1170, 0
      %v1303 = vsel %vm1274, %v1171, 0
      %v1306 = vsel %vm1274, %v1172, 0
      %v1309 = vsel %vm1274, %v1173, 0
      %v1312 = vsel %vm1274, %v1174, 0
      %v1315 = vsel %vm1274, %v1175, 0
      %v1318 = vsel %vm1274, %v1176, 0
      %v1321 = vsel %vm1274, %v1177, 0
      %v1324 = vsel %vm1274, %v1194, 0
      %v1327 = vsel %vm1274, %v1195, 0
      %v1330 = vsel %vm1274, %v1196, 0
      %v1333 = vsel %vm1274, %v1197, 0
      %v1336 = vsel %vm1274, %v1198, 0
      %v1339 = vsel %vm1274, %v1199, 0
      %v1342 = vsel %vm1274, %v1200, 0
      %v1345 = vsel %vm1274, %v1201, 0
      %v1348 = vsel %vm1274, %v1202, 0
      %v1351 = vsel %vm1274, %v1203, 0
      %v1354 = vsel %vm1274, %v1204, 0
      %v1357 = vsel %vm1274, %v1205, 0
      %v1360 = vsel %vm1274, %v1206, 0
      %v1363 = vsel %vm1274, %v1207, 0
      %v1366 = vsel %vm1274, %v1208, 0
      %v1369 = vsel %vm1274, %v1209, 0
      %v1372 = vsel %vm1274, %v1226, 0
      %v1375 = vsel %vm1274, %v1227, 0
      %v1378 = vsel %vm1274, %v1228, 0
      %v1381 = vsel %vm1274, %v1229, 0
      %v1384 = vsel %vm1274, %v1230, 0
      %v1387 = vsel %vm1274, %v1231, 0
      %v1390 = vsel %vm1274, %v1232, 0
      %v1393 = vsel %vm1274, %v1233, 0
      %v1396 = vsel %vm1274, %v1234, 0
      %v1399 = vsel %vm1274, %v1235, 0
      %v1402 = vsel %vm1274, %v1236, 0
      %v1405 = vsel %vm1274, %v1237, 0
      %v1408 = vsel %vm1274, %v1238, 0
      %v1411 = vsel %vm1274, %v1239, 0
      %v1414 = vsel %vm1274, %v1240, 0
      %v1417 = vsel %vm1274, %v1241, 0
      %v1420 = vsel %vm1274, %v1258, 0
      %v1423 = vsel %vm1274, %v1259, 0
      %v1426 = vsel %vm1274, %v1260, 0
      %v1429 = vsel %vm1274, %v1261, 0
      %v1432 = vsel %vm1274, %v1262, 0
      %v1435 = vsel %vm1274, %v1263, 0
      %v1438 = vsel %vm1274, %v1264, 0
      %v1441 = vsel %vm1274, %v1265, 0
      %v1444 = vsel %vm1274, %v1266, 0
      %v1447 = vsel %vm1274, %v1267, 0
      %v1450 = vsel %vm1274, %v1268, 0
      %v1453 = vsel %vm1274, %v1269, 0
      %v1456 = vsel %vm1274, %v1270, 0
      %v1459 = vsel %vm1274, %v1271, 0
      %v1462 = vsel %vm1274, %v1272, 0
      %v1465 = vsel %vm1274, %v1273, 0
      %1467 = vmatprep.subr.mxu0 0.0
      %1468 = vmatpush1.msra.mxu0 %v497
      %1469 = vmatprep.subr.mxu0 0.0
      %1470 = vmatpush1.msra.mxu0 %v498
      %1471 = vmatprep.subr.mxu0 0.0
      %1472 = vmatpush1.msra.mxu0 0.0
      %1473 = vmatprep.subr.mxu0 0.0
      %1474 = vmatpush1.msra.mxu0 0.0
      %1475 = vmatprep.subr.mxu0 0.0
      %1476 = vmatpush1.msra.mxu0 0.0
      %1477 = vmatprep.subr.mxu0 0.0
      %1478 = vmatpush1.msra.mxu0 0.0
      %1479 = vmatprep.subr.mxu0 0.0
      %1480 = vmatpush1.msra.mxu0 0.0
      %1481 = vmatprep.subr.mxu0 0.0
      %1482 = vmatpush1.msra.mxu0 0.0
      %1483 = vmatprep.subr.mxu0 0.0
      %1484 = vmatpush1.msra.mxu0 0.0
      %1485 = vmatprep.subr.mxu0 0.0
      %1486 = vmatpush1.msra.mxu0 0.0
      %1487 = vmatprep.subr.mxu0 0.0
      %1488 = vmatpush1.msra.mxu0 0.0
      %1489 = vmatprep.subr.mxu0 0.0
      %1490 = vmatpush1.msra.mxu0 0.0
      %1491 = vmatprep.subr.mxu0 0.0
      %1492 = vmatpush1.msra.mxu0 0.0
      %1493 = vmatprep.subr.mxu0 0.0
      %1494 = vmatpush1.msra.mxu0 0.0
      %1495 = vmatprep.subr.mxu0 0.0
      %1496 = vmatpush1.msra.mxu0 0.0
      %1497 = vmatprep.subr.mxu0 0.0
      %1498 = vmatpush1.msra.mxu0 0.0
      %1499 = vmatprep.subr.mxu0 0.0
      %1500 = vmatpush1.msra.mxu0 0.0
      %1501 = vmatprep.subr.mxu0 0.0
      %1502 = vmatpush1.msra.mxu0 0.0
      %1503 = vmatprep.subr.mxu0 0.0
      %1504 = vmatpush1.msra.mxu0 0.0
      %1505 = vmatprep.subr.mxu0 0.0
      %1506 = vmatpush1.msra.mxu0 0.0
      %1507 = vmatprep.subr.mxu0 0.0
      %1508 = vmatpush1.msra.mxu0 0.0
      %1509 = vmatprep.subr.mxu0 0.0
      %1510 = vmatpush1.msra.mxu0 0.0
      %1511 = vmatprep.subr.mxu0 0.0
      %1512 = vmatpush1.msra.mxu0 0.0
      %1513 = vmatprep.subr.mxu0 0.0
      %1514 = vmatpush1.msra.mxu0 0.0
      %1515 = vmatprep.subr.mxu0 0.0
      %1516 = vmatpush1.msra.mxu0 0.0
      %1517 = vmatprep.subr.mxu0 0.0
      %1518 = vmatpush1.msra.mxu0 0.0
      %1519 = vmatprep.subr.mxu0 0.0
      %1520 = vmatpush1.msra.mxu0 0.0
      %1521 = vmatprep.subr.mxu0 0.0
      %1522 = vmatpush1.msra.mxu0 0.0
      %1523 = vmatprep.subr.mxu0 0.0
      %1524 = vmatpush1.msra.mxu0 0.0
      %1525 = vmatprep.subr.mxu0 0.0
      %1526 = vmatpush1.msra.mxu0 0.0
      %1527 = vmatprep.subr.mxu0 0.0
      %1528 = vmatpush1.msra.mxu0 0.0
      %1529 = vmatprep.subr.mxu0 0.0
      %1530 = vmatpush1.msra.mxu0 0.0
      %1531 = vmatprep.mubr.f32.mxu0 0.0
      %1532 = vmatmul.mubr.f32.gmra.mrb[0].mxu0 %v1276
      %v1533 = vpop.f32.mrb[0].mxu0
      %v1534 = vadd.f32 %v828, %v1533
      %v1535 = vpop.f32.mrb[0].mxu0
      %1536 = vmatprep.mubr.f32.mxu0 0.0
      %1537 = vmatmul.mubr.f32.gmra.mrb[0].mxu0 %v1279
      %v1538 = vpop.f32.mrb[0].mxu0
      %v1539 = vadd.f32 %v833, %v1538
      %v1540 = vpop.f32.mrb[0].mxu0
      %1541 = vmatprep.mubr.f32.mxu0 0.0
      %1542 = vmatmul.mubr.f32.gmra.mrb[0].mxu0 %v1282
      %v1543 = vpop.f32.mrb[0].mxu0
      %v1544 = vadd.f32 %v838, %v1543
      %v1545 = vpop.f32.mrb[0].mxu0
      %1546 = vmatprep.mubr.f32.mxu0 0.0
      %1547 = vmatmul.mubr.f32.gmra.mrb[0].mxu0 %v1285
      %v1548 = vpop.f32.mrb[0].mxu0
      %v1549 = vadd.f32 %v843, %v1548
      %v1550 = vpop.f32.mrb[0].mxu0
      %1551 = vmatprep.mubr.f32.mxu0 0.0
      %1552 = vmatmul.mubr.f32.gmra.mrb[0].mxu0 %v1288
      %v1553 = vpop.f32.mrb[0].mxu0
      %v1554 = vadd.f32 %v848, %v1553
      %v1555 = vpop.f32.mrb[0].mxu0
      %1556 = vmatprep.mubr.f32.mxu0 0.0
      %1557 = vmatmul.mubr.f32.gmra.mrb[0].mxu0 %v1291
      %v1558 = vpop.f32.mrb[0].mxu0
      %v1559 = vadd.f32 %v853, %v1558
      %v1560 = vpop.f32.mrb[0].mxu0
      %1561 = vmatprep.mubr.f32.mxu0 0.0
      %1562 = vmatmul.mubr.f32.gmra.mrb[0].mxu0 %v1294
      %v1563 = vpop.f32.mrb[0].mxu0
      %v1564 = vadd.f32 %v858, %v1563
      %v1565 = vpop.f32.mrb[0].mxu0
      %1566 = vmatprep.mubr.f32.mxu0 0.0
      %1567 = vmatmul.mubr.f32.gmra.mrb[0].mxu0 %v1297
      %v1568 = vpop.f32.mrb[0].mxu0
      %v1569 = vadd.f32 %v863, %v1568
      %v1570 = vpop.f32.mrb[0].mxu0
      %1571 = vmatprep.mubr.f32.mxu0 0.0
      %1572 = vmatmul.mubr.f32.gmra.mrb[0].mxu0 %v1300
      %v1573 = vpop.f32.mrb[0].mxu0
      %v1574 = vadd.f32 %v868, %v1573
      %v1575 = vpop.f32.mrb[0].mxu0
      %1576 = vmatprep.mubr.f32.mxu0 0.0
      %1577 = vmatmul.mubr.f32.gmra.mrb[0].mxu0 %v1303
      %v1578 = vpop.f32.mrb[0].mxu0
      %v1579 = vadd.f32 %v873, %v1578
      %v1580 = vpop.f32.mrb[0].mxu0
      %1581 = vmatprep.mubr.f32.mxu0 0.0
      %1582 = vmatmul.mubr.f32.gmra.mrb[0].mxu0 %v1306
      %v1583 = vpop.f32.mrb[0].mxu0
      %v1584 = vadd.f32 %v878, %v1583
      %v1585 = vpop.f32.mrb[0].mxu0
      %1586 = vmatprep.mubr.f32.mxu0 0.0
      %1587 = vmatmul.mubr.f32.gmra.mrb[0].mxu0 %v1309
      %v1588 = vpop.f32.mrb[0].mxu0
      %v1589 = vadd.f32 %v883, %v1588
      %v1590 = vpop.f32.mrb[0].mxu0
      %1591 = vmatprep.mubr.f32.mxu0 0.0
      %1592 = vmatmul.mubr.f32.gmra.mrb[0].mxu0 %v1312
      %v1593 = vpop.f32.mrb[0].mxu0
      %v1594 = vadd.f32 %v888, %v1593
      %v1595 = vpop.f32.mrb[0].mxu0
      %1596 = vmatprep.mubr.f32.mxu0 0.0
      %1597 = vmatmul.mubr.f32.gmra.mrb[0].mxu0 %v1315
      %v1598 = vpop.f32.mrb[0].mxu0
      %v1599 = vadd.f32 %v893, %v1598
      %v1600 = vpop.f32.mrb[0].mxu0
      %1601 = vmatprep.mubr.f32.mxu0 0.0
      %1602 = vmatmul.mubr.f32.gmra.mrb[0].mxu0 %v1318
      %v1603 = vpop.f32.mrb[0].mxu0
      %v1604 = vadd.f32 %v898, %v1603
      %v1605 = vpop.f32.mrb[0].mxu0
      %1606 = vmatprep.mubr.f32.mxu0 0.0
      %1607 = vmatmul.mubr.f32.gmra.mrb[0].mxu0 %v1321
      %v1608 = vpop.f32.mrb[0].mxu0
      %v1609 = vadd.f32 %v903, %v1608
      %v1610 = vpop.f32.mrb[0].mxu0
      %1611 = vmatprep.mubr.f32.mxu0 0.0
      %1612 = vmatmul.mubr.f32.gmra.mrb[0].mxu0 %v1324
      %v1613 = vpop.f32.mrb[0].mxu0
      %v1614 = vadd.f32 %v908, %v1613
      %v1615 = vpop.f32.mrb[0].mxu0
      %1616 = vmatprep.mubr.f32.mxu0 0.0
      %1617 = vmatmul.mubr.f32.gmra.mrb[0].mxu0 %v1327
      %v1618 = vpop.f32.mrb[0].mxu0
      %v1619 = vadd.f32 %v913, %v1618
      %v1620 = vpop.f32.mrb[0].mxu0
      %1621 = vmatprep.mubr.f32.mxu0 0.0
      %1622 = vmatmul.mubr.f32.gmra.mrb[0].mxu0 %v1330
      %v1623 = vpop.f32.mrb[0].mxu0
      %v1624 = vadd.f32 %v918, %v1623
      %v1625 = vpop.f32.mrb[0].mxu0
      %1626 = vmatprep.mubr.f32.mxu0 0.0
      %1627 = vmatmul.mubr.f32.gmra.mrb[0].mxu0 %v1333
      %v1628 = vpop.f32.mrb[0].mxu0
      %v1629 = vadd.f32 %v923, %v1628
      %v1630 = vpop.f32.mrb[0].mxu0
      %1631 = vmatprep.mubr.f32.mxu0 0.0
      %1632 = vmatmul.mubr.f32.gmra.mrb[0].mxu0 %v1336
      %v1633 = vpop.f32.mrb[0].mxu0
      %v1634 = vadd.f32 %v928, %v1633
      %v1635 = vpop.f32.mrb[0].mxu0
      %1636 = vmatprep.mubr.f32.mxu0 0.0
      %1637 = vmatmul.mubr.f32.gmra.mrb[0].mxu0 %v1339
      %v1638 = vpop.f32.mrb[0].mxu0
      %v1639 = vadd.f32 %v933, %v1638
      %v1640 = vpop.f32.mrb[0].mxu0
      %1641 = vmatprep.mubr.f32.mxu0 0.0
      %1642 = vmatmul.mubr.f32.gmra.mrb[0].mxu0 %v1342
      %v1643 = vpop.f32.mrb[0].mxu0
      %v1644 = vadd.f32 %v938, %v1643
      %v1645 = vpop.f32.mrb[0].mxu0
      %1646 = vmatprep.mubr.f32.mxu0 0.0
      %1647 = vmatmul.mubr.f32.gmra.mrb[0].mxu0 %v1345
      %v1648 = vpop.f32.mrb[0].mxu0
      %v1649 = vadd.f32 %v943, %v1648
      %v1650 = vpop.f32.mrb[0].mxu0
      %1651 = vmatprep.mubr.f32.mxu0 0.0
      %1652 = vmatmul.mubr.f32.gmra.mrb[0].mxu0 %v1348
      %v1653 = vpop.f32.mrb[0].mxu0
      %v1654 = vadd.f32 %v948, %v1653
      %v1655 = vpop.f32.mrb[0].mxu0
      %1656 = vmatprep.mubr.f32.mxu0 0.0
      %1657 = vmatmul.mubr.f32.gmra.mrb[0].mxu0 %v1351
      %v1658 = vpop.f32.mrb[0].mxu0
      %v1659 = vadd.f32 %v953, %v1658
      %v1660 = vpop.f32.mrb[0].mxu0
      %1661 = vmatprep.mubr.f32.mxu0 0.0
      %1662 = vmatmul.mubr.f32.gmra.mrb[0].mxu0 %v1354
      %v1663 = vpop.f32.mrb[0].mxu0
      %v1664 = vadd.f32 %v958, %v1663
      %v1665 = vpop.f32.mrb[0].mxu0
      %1666 = vmatprep.mubr.f32.mxu0 0.0
      %1667 = vmatmul.mubr.f32.gmra.mrb[0].mxu0 %v1357
      %v1668 = vpop.f32.mrb[0].mxu0
      %v1669 = vadd.f32 %v963, %v1668
      %v1670 = vpop.f32.mrb[0].mxu0
      %1671 = vmatprep.mubr.f32.mxu0 0.0
      %1672 = vmatmul.mubr.f32.gmra.mrb[0].mxu0 %v1360
      %v1673 = vpop.f32.mrb[0].mxu0
      %v1674 = vadd.f32 %v968, %v1673
      %v1675 = vpop.f32.mrb[0].mxu0
      %1676 = vmatprep.mubr.f32.mxu0 0.0
      %1677 = vmatmul.mubr.f32.gmra.mrb[0].mxu0 %v1363
      %v1678 = vpop.f32.mrb[0].mxu0
      %v1679 = vadd.f32 %v973, %v1678
      %v1680 = vpop.f32.mrb[0].mxu0
      %1681 = vmatprep.mubr.f32.mxu0 0.0
      %1682 = vmatmul.mubr.f32.gmra.mrb[0].mxu0 %v1366
      %v1683 = vpop.f32.mrb[0].mxu0
      %v1684 = vadd.f32 %v978, %v1683
      %v1685 = vpop.f32.mrb[0].mxu0
      %1686 = vmatprep.mubr.f32.mxu0 0.0
      %1687 = vmatmul.mubr.f32.gmra.mrb[0].mxu0 %v1369
      %v1688 = vpop.f32.mrb[0].mxu0
      %v1689 = vadd.f32 %v983, %v1688
      %v1690 = vpop.f32.mrb[0].mxu0
      %1691 = vmatprep.mubr.f32.mxu0 0.0
      %1692 = vmatmul.mubr.f32.gmra.mrb[0].mxu0 %v1372
      %v1693 = vpop.f32.mrb[0].mxu0
      %v1694 = vadd.f32 %v988, %v1693
      %v1695 = vpop.f32.mrb[0].mxu0
      %1696 = vmatprep.mubr.f32.mxu0 0.0
      %1697 = vmatmul.mubr.f32.gmra.mrb[0].mxu0 %v1375
      %v1698 = vpop.f32.mrb[0].mxu0
      %v1699 = vadd.f32 %v993, %v1698
      %v1700 = vpop.f32.mrb[0].mxu0
      %1701 = vmatprep.mubr.f32.mxu0 0.0
      %1702 = vmatmul.mubr.f32.gmra.mrb[0].mxu0 %v1378
      %v1703 = vpop.f32.mrb[0].mxu0
      %v1704 = vadd.f32 %v998, %v1703
      %v1705 = vpop.f32.mrb[0].mxu0
      %1706 = vmatprep.mubr.f32.mxu0 0.0
      %1707 = vmatmul.mubr.f32.gmra.mrb[0].mxu0 %v1381
      %v1708 = vpop.f32.mrb[0].mxu0
      %v1709 = vadd.f32 %v1003, %v1708
      %v1710 = vpop.f32.mrb[0].mxu0
      %1711 = vmatprep.mubr.f32.mxu0 0.0
      %1712 = vmatmul.mubr.f32.gmra.mrb[0].mxu0 %v1384
      %v1713 = vpop.f32.mrb[0].mxu0
      %v1714 = vadd.f32 %v1008, %v1713
      %v1715 = vpop.f32.mrb[0].mxu0
      %1716 = vmatprep.mubr.f32.mxu0 0.0
      %1717 = vmatmul.mubr.f32.gmra.mrb[0].mxu0 %v1387
      %v1718 = vpop.f32.mrb[0].mxu0
      %v1719 = vadd.f32 %v1013, %v1718
      %v1720 = vpop.f32.mrb[0].mxu0
      %1721 = vmatprep.mubr.f32.mxu0 0.0
      %1722 = vmatmul.mubr.f32.gmra.mrb[0].mxu0 %v1390
      %v1723 = vpop.f32.mrb[0].mxu0
      %v1724 = vadd.f32 %v1018, %v1723
      %v1725 = vpop.f32.mrb[0].mxu0
      %1726 = vmatprep.mubr.f32.mxu0 0.0
      %1727 = vmatmul.mubr.f32.gmra.mrb[0].mxu0 %v1393
      %v1728 = vpop.f32.mrb[0].mxu0
      %v1729 = vadd.f32 %v1023, %v1728
      %v1730 = vpop.f32.mrb[0].mxu0
      %1731 = vmatprep.mubr.f32.mxu0 0.0
      %1732 = vmatmul.mubr.f32.gmra.mrb[0].mxu0 %v1396
      %v1733 = vpop.f32.mrb[0].mxu0
      %v1734 = vadd.f32 %v1028, %v1733
      %v1735 = vpop.f32.mrb[0].mxu0
      %1736 = vmatprep.mubr.f32.mxu0 0.0
      %1737 = vmatmul.mubr.f32.gmra.mrb[0].mxu0 %v1399
      %v1738 = vpop.f32.mrb[0].mxu0
      %v1739 = vadd.f32 %v1033, %v1738
      %v1740 = vpop.f32.mrb[0].mxu0
      %1741 = vmatprep.mubr.f32.mxu0 0.0
      %1742 = vmatmul.mubr.f32.gmra.mrb[0].mxu0 %v1402
      %v1743 = vpop.f32.mrb[0].mxu0
      %v1744 = vadd.f32 %v1038, %v1743
      %v1745 = vpop.f32.mrb[0].mxu0
      %1746 = vmatprep.mubr.f32.mxu0 0.0
      %1747 = vmatmul.mubr.f32.gmra.mrb[0].mxu0 %v1405
      %v1748 = vpop.f32.mrb[0].mxu0
      %v1749 = vadd.f32 %v1043, %v1748
      %v1750 = vpop.f32.mrb[0].mxu0
      %1751 = vmatprep.mubr.f32.mxu0 0.0
      %1752 = vmatmul.mubr.f32.gmra.mrb[0].mxu0 %v1408
      %v1753 = vpop.f32.mrb[0].mxu0
      %v1754 = vadd.f32 %v1048, %v1753
      %v1755 = vpop.f32.mrb[0].mxu0
      %1756 = vmatprep.mubr.f32.mxu0 0.0
      %1757 = vmatmul.mubr.f32.gmra.mrb[0].mxu0 %v1411
      %v1758 = vpop.f32.mrb[0].mxu0
      %v1759 = vadd.f32 %v1053, %v1758
      %v1760 = vpop.f32.mrb[0].mxu0
      %1761 = vmatprep.mubr.f32.mxu0 0.0
      %1762 = vmatmul.mubr.f32.gmra.mrb[0].mxu0 %v1414
      %v1763 = vpop.f32.mrb[0].mxu0
      %v1764 = vadd.f32 %v1058, %v1763
      %v1765 = vpop.f32.mrb[0].mxu0
      %1766 = vmatprep.mubr.f32.mxu0 0.0
      %1767 = vmatmul.mubr.f32.gmra.mrb[0].mxu0 %v1417
      %v1768 = vpop.f32.mrb[0].mxu0
      %v1769 = vadd.f32 %v1063, %v1768
      %v1770 = vpop.f32.mrb[0].mxu0
      %1771 = vmatprep.mubr.f32.mxu0 0.0
      %1772 = vmatmul.mubr.f32.gmra.mrb[0].mxu0 %v1420
      %v1773 = vpop.f32.mrb[0].mxu0
      %v1774 = vadd.f32 %v1068, %v1773
      %v1775 = vpop.f32.mrb[0].mxu0
      %1776 = vmatprep.mubr.f32.mxu0 0.0
      %1777 = vmatmul.mubr.f32.gmra.mrb[0].mxu0 %v1423
      %v1778 = vpop.f32.mrb[0].mxu0
      %v1779 = vadd.f32 %v1073, %v1778
      %v1780 = vpop.f32.mrb[0].mxu0
      %1781 = vmatprep.mubr.f32.mxu0 0.0
      %1782 = vmatmul.mubr.f32.gmra.mrb[0].mxu0 %v1426
      %v1783 = vpop.f32.mrb[0].mxu0
      %v1784 = vadd.f32 %v1078, %v1783
      %v1785 = vpop.f32.mrb[0].mxu0
      %1786 = vmatprep.mubr.f32.mxu0 0.0
      %1787 = vmatmul.mubr.f32.gmra.mrb[0].mxu0 %v1429
      %v1788 = vpop.f32.mrb[0].mxu0
      %v1789 = vadd.f32 %v1083, %v1788
      %v1790 = vpop.f32.mrb[0].mxu0
      %1791 = vmatprep.mubr.f32.mxu0 0.0
      %1792 = vmatmul.mubr.f32.gmra.mrb[0].mxu0 %v1432
      %v1793 = vpop.f32.mrb[0].mxu0
      %v1794 = vadd.f32 %v1088, %v1793
      %v1795 = vpop.f32.mrb[0].mxu0
      %1796 = vmatprep.mubr.f32.mxu0 0.0
      %1797 = vmatmul.mubr.f32.gmra.mrb[0].mxu0 %v1435
      %v1798 = vpop.f32.mrb[0].mxu0
      %v1799 = vadd.f32 %v1093, %v1798
      %v1800 = vpop.f32.mrb[0].mxu0
      %1801 = vmatprep.mubr.f32.mxu0 0.0
      %1802 = vmatmul.mubr.f32.gmra.mrb[0].mxu0 %v1438
      %v1803 = vpop.f32.mrb[0].mxu0
      %v1804 = vadd.f32 %v1098, %v1803
      %v1805 = vpop.f32.mrb[0].mxu0
      %1806 = vmatprep.mubr.f32.mxu0 0.0
      %1807 = vmatmul.mubr.f32.gmra.mrb[0].mxu0 %v1441
      %v1808 = vpop.f32.mrb[0].mxu0
      %v1809 = vadd.f32 %v1103, %v1808
      %v1810 = vpop.f32.mrb[0].mxu0
      %1811 = vmatprep.mubr.f32.mxu0 0.0
      %1812 = vmatmul.mubr.f32.gmra.mrb[0].mxu0 %v1444
      %v1813 = vpop.f32.mrb[0].mxu0
      %v1814 = vadd.f32 %v1108, %v1813
      %v1815 = vpop.f32.mrb[0].mxu0
      %1816 = vmatprep.mubr.f32.mxu0 0.0
      %1817 = vmatmul.mubr.f32.gmra.mrb[0].mxu0 %v1447
      %v1818 = vpop.f32.mrb[0].mxu0
      %v1819 = vadd.f32 %v1113, %v1818
      %v1820 = vpop.f32.mrb[0].mxu0
      %1821 = vmatprep.mubr.f32.mxu0 0.0
      %1822 = vmatmul.mubr.f32.gmra.mrb[0].mxu0 %v1450
      %v1823 = vpop.f32.mrb[0].mxu0
      %v1824 = vadd.f32 %v1118, %v1823
      %v1825 = vpop.f32.mrb[0].mxu0
      %1826 = vmatprep.mubr.f32.mxu0 0.0
      %1827 = vmatmul.mubr.f32.gmra.mrb[0].mxu0 %v1453
      %v1828 = vpop.f32.mrb[0].mxu0
      %v1829 = vadd.f32 %v1123, %v1828
      %v1830 = vpop.f32.mrb[0].mxu0
      %1831 = vmatprep.mubr.f32.mxu0 0.0
      %1832 = vmatmul.mubr.f32.gmra.mrb[0].mxu0 %v1456
      %v1833 = vpop.f32.mrb[0].mxu0
      %v1834 = vadd.f32 %v1128, %v1833
      %v1835 = vpop.f32.mrb[0].mxu0
      %1836 = vmatprep.mubr.f32.mxu0 0.0
      %1837 = vmatmul.mubr.f32.gmra.mrb[0].mxu0 %v1459
      %v1838 = vpop.f32.mrb[0].mxu0
      %v1839 = vadd.f32 %v1133, %v1838
      %v1840 = vpop.f32.mrb[0].mxu0
      %1841 = vmatprep.mubr.f32.mxu0 0.0
      %1842 = vmatmul.mubr.f32.gmra.mrb[0].mxu0 %v1462
      %v1843 = vpop.f32.mrb[0].mxu0
      %v1844 = vadd.f32 %v1138, %v1843
      %v1845 = vpop.f32.mrb[0].mxu0
      %1846 = vmatprep.mubr.f32.mxu0 0.0
      %1847 = vmatmul.mubr.f32.gmra.mrb[0].mxu0 %v1465
      %v1848 = vpop.f32.mrb[0].mxu0
      %v1849 = vadd.f32 %v1143, %v1848
      %v1850 = vpop.f32.mrb[0].mxu0
      %1851 = vdwg.mxu0
      %v1852 = vld [vmem:[%s5] sm:$0x1]
      %v1854 = vlaneseq
      %v1855 = vshrl.u32 %v1854, 7
      %v1856 = vsub.s32 0, %v1855
      %v1857 = vrot.slane %v1852, %v1856
      %v1859 = vadd.f32 %v1534, %v1857
      %v1860 = vadd.f32 %v1539, %v1857
      %v1861 = vadd.f32 %v1544, %v1857
      %v1862 = vadd.f32 %v1549, %v1857
      %v1863 = vadd.f32 %v1554, %v1857
      %v1864 = vadd.f32 %v1559, %v1857
      %v1865 = vadd.f32 %v1564, %v1857
      %v1866 = vadd.f32 %v1569, %v1857
      %v1867 = vadd.f32 %v1574, %v1857
      %v1868 = vadd.f32 %v1579, %v1857
      %v1869 = vadd.f32 %v1584, %v1857
      %v1870 = vadd.f32 %v1589, %v1857
      %v1871 = vadd.f32 %v1594, %v1857
      %v1872 = vadd.f32 %v1599, %v1857
      %v1873 = vadd.f32 %v1604, %v1857
      %v1874 = vadd.f32 %v1609, %v1857
      %v1875 = vadd.f32 %v1614, %v1857
      %v1876 = vadd.f32 %v1619, %v1857
      %v1877 = vadd.f32 %v1624, %v1857
      %v1878 = vadd.f32 %v1629, %v1857
      %v1879 = vadd.f32 %v1634, %v1857
      %v1880 = vadd.f32 %v1639, %v1857
      %v1881 = vadd.f32 %v1644, %v1857
      %v1882 = vadd.f32 %v1649, %v1857
      %v1883 = vadd.f32 %v1654, %v1857
      %v1884 = vadd.f32 %v1659, %v1857
      %v1885 = vadd.f32 %v1664, %v1857
      %v1886 = vadd.f32 %v1669, %v1857
      %v1887 = vadd.f32 %v1674, %v1857
      %v1888 = vadd.f32 %v1679, %v1857
      %v1889 = vadd.f32 %v1684, %v1857
      %v1890 = vadd.f32 %v1689, %v1857
      %v1891 = vadd.f32 %v1694, %v1857
      %v1892 = vadd.f32 %v1699, %v1857
      %v1893 = vadd.f32 %v1704, %v1857
      %v1894 = vadd.f32 %v1709, %v1857
      %v1895 = vadd.f32 %v1714, %v1857
      %v1896 = vadd.f32 %v1719, %v1857
      %v1897 = vadd.f32 %v1724, %v1857
      %v1898 = vadd.f32 %v1729, %v1857
      %v1899 = vadd.f32 %v1734, %v1857
      %v1900 = vadd.f32 %v1739, %v1857
      %v1901 = vadd.f32 %v1744, %v1857
      %v1902 = vadd.f32 %v1749, %v1857
      %v1903 = vadd.f32 %v1754, %v1857
      %v1904 = vadd.f32 %v1759, %v1857
      %v1905 = vadd.f32 %v1764, %v1857
      %v1906 = vadd.f32 %v1769, %v1857
      %v1907 = vadd.f32 %v1774, %v1857
      %v1908 = vadd.f32 %v1779, %v1857
      %v1909 = vadd.f32 %v1784, %v1857
      %v1910 = vadd.f32 %v1789, %v1857
      %v1911 = vadd.f32 %v1794, %v1857
      %v1912 = vadd.f32 %v1799, %v1857
      %v1913 = vadd.f32 %v1804, %v1857
      %v1914 = vadd.f32 %v1809, %v1857
      %v1915 = vadd.f32 %v1814, %v1857
      %v1916 = vadd.f32 %v1819, %v1857
      %v1917 = vadd.f32 %v1824, %v1857
      %v1918 = vadd.f32 %v1829, %v1857
      %v1919 = vadd.f32 %v1834, %v1857
      %v1920 = vadd.f32 %v1839, %v1857
      %v1921 = vadd.f32 %v1844, %v1857
      %v1922 = vadd.f32 %v1849, %v1857
      %v1923 = vmax.f32 %v1859, 0.0
      %v1924 = vmax.f32 %v1860, 0.0
      %v1925 = vmax.f32 %v1861, 0.0
      %v1926 = vmax.f32 %v1862, 0.0
      %v1927 = vmax.f32 %v1863, 0.0
      %v1928 = vmax.f32 %v1864, 0.0
      %v1929 = vmax.f32 %v1865, 0.0
      %v1930 = vmax.f32 %v1866, 0.0
      %v1931 = vmax.f32 %v1867, 0.0
      %v1932 = vmax.f32 %v1868, 0.0
      %v1933 = vmax.f32 %v1869, 0.0
      %v1934 = vmax.f32 %v1870, 0.0
      %v1935 = vmax.f32 %v1871, 0.0
      %v1936 = vmax.f32 %v1872, 0.0
      %v1937 = vmax.f32 %v1873, 0.0
      %v1938 = vmax.f32 %v1874, 0.0
      %v1939 = vmax.f32 %v1875, 0.0
      %v1940 = vmax.f32 %v1876, 0.0
      %v1941 = vmax.f32 %v1877, 0.0
      %v1942 = vmax.f32 %v1878, 0.0
      %v1943 = vmax.f32 %v1879, 0.0
      %v1944 = vmax.f32 %v1880, 0.0
      %v1945 = vmax.f32 %v1881, 0.0
      %v1946 = vmax.f32 %v1882, 0.0
      %v1947 = vmax.f32 %v1883, 0.0
      %v1948 = vmax.f32 %v1884, 0.0
      %v1949 = vmax.f32 %v1885, 0.0
      %v1950 = vmax.f32 %v1886, 0.0
      %v1951 = vmax.f32 %v1887, 0.0
      %v1952 = vmax.f32 %v1888, 0.0
      %v1953 = vmax.f32 %v1889, 0.0
      %v1954 = vmax.f32 %v1890, 0.0
      %v1955 = vmax.f32 %v1891, 0.0
      %v1956 = vmax.f32 %v1892, 0.0
      %v1957 = vmax.f32 %v1893, 0.0
      %v1958 = vmax.f32 %v1894, 0.0
      %v1959 = vmax.f32 %v1895, 0.0
      %v1960 = vmax.f32 %v1896, 0.0
      %v1961 = vmax.f32 %v1897, 0.0
      %v1962 = vmax.f32 %v1898, 0.0
      %v1963 = vmax.f32 %v1899, 0.0
      %v1964 = vmax.f32 %v1900, 0.0
      %v1965 = vmax.f32 %v1901, 0.0
      %v1966 = vmax.f32 %v1902, 0.0
      %v1967 = vmax.f32 %v1903, 0.0
      %v1968 = vmax.f32 %v1904, 0.0
      %v1969 = vmax.f32 %v1905, 0.0
      %v1970 = vmax.f32 %v1906, 0.0
      %v1971 = vmax.f32 %v1907, 0.0
      %v1972 = vmax.f32 %v1908, 0.0
      %v1973 = vmax.f32 %v1909, 0.0
      %v1974 = vmax.f32 %v1910, 0.0
      %v1975 = vmax.f32 %v1911, 0.0
      %v1976 = vmax.f32 %v1912, 0.0
      %v1977 = vmax.f32 %v1913, 0.0
      %v1978 = vmax.f32 %v1914, 0.0
      %v1979 = vmax.f32 %v1915, 0.0
      %v1980 = vmax.f32 %v1916, 0.0
      %v1981 = vmax.f32 %v1917, 0.0
      %v1982 = vmax.f32 %v1918, 0.0
      %v1983 = vmax.f32 %v1919, 0.0
      %v1984 = vmax.f32 %v1920, 0.0
      %v1985 = vmax.f32 %v1921, 0.0
      %v1986 = vmax.f32 %v1922, 0.0
      %s1987 = smul.u32 %s447, 512
      %v1988 = vadd.s32 %v455, 16
      %v1989 = vadd.s32 %v455, 24
      %v1990 = vadd.s32 %v455, 32
      %v1991 = vadd.s32 %v455, 40
      %v1992 = vadd.s32 %v455, 48
      %v1993 = vadd.s32 %v455, 56
      %v1994 = vadd.s32 %v455, 64
      %v1995 = vadd.s32 %v455, 72
      %v1996 = vadd.s32 %v455, 80
      %v1997 = vadd.s32 %v455, 88
      %v1998 = vadd.s32 %v455, 96
      %v1999 = vadd.s32 %v455, 104
      %v2000 = vadd.s32 %v455, 112
      %v2001 = vadd.s32 %v455, 120
      %v2002 = vadd.s32 %v455, 128
      %v2003 = vadd.s32 %v455, 136
      %v2004 = vadd.s32 %v455, 144
      %v2005 = vadd.s32 %v455, 152
      %v2006 = vadd.s32 %v455, 160
      %v2007 = vadd.s32 %v455, 168
      %v2008 = vadd.s32 %v455, 176
      %v2009 = vadd.s32 %v455, 184
      %v2010 = vadd.s32 %v455, 192
      %v2011 = vadd.s32 %v455, 200
      %v2012 = vadd.s32 %v455, 208
      %v2013 = vadd.s32 %v455, 216
      %v2014 = vadd.s32 %v455, 224
      %v2015 = vadd.s32 %v455, 232
      %v2016 = vadd.s32 %v455, 240
      %v2017 = vadd.s32 %v455, 248
      %v2018 = vadd.s32 %v455, 256
      %v2019 = vadd.s32 %v455, 264
      %v2020 = vadd.s32 %v455, 272
      %v2021 = vadd.s32 %v455, 280
      %v2022 = vadd.s32 %v455, 288
      %v2023 = vadd.s32 %v455, 296
      %v2024 = vadd.s32 %v455, 304
      %v2025 = vadd.s32 %v455, 312
      %v2026 = vadd.s32 %v455, 320
      %v2027 = vadd.s32 %v455, 328
      %v2028 = vadd.s32 %v455, 336
      %v2029 = vadd.s32 %v455, 344
      %v2030 = vadd.s32 %v455, 352
      %v2031 = vadd.s32 %v455, 360
      %v2032 = vadd.s32 %v455, 368
      %v2033 = vadd.s32 %v455, 376
      %v2034 = vadd.s32 %v455, 384
      %v2035 = vadd.s32 %v455, 392
      %v2036 = vadd.s32 %v455, 400
      %v2037 = vadd.s32 %v455, 408
      %v2038 = vadd.s32 %v455, 416
      %v2039 = vadd.s32 %v455, 424
      %v2040 = vadd.s32 %v455, 432
      %v2041 = vadd.s32 %v455, 440
      %v2042 = vadd.s32 %v455, 448
      %v2043 = vadd.s32 %v455, 456
      %v2044 = vadd.s32 %v455, 464
      %v2045 = vadd.s32 %v455, 472
      %v2046 = vadd.s32 %v455, 480
      %v2047 = vadd.s32 %v455, 488
      %v2048 = vadd.s32 %v455, 496
      %v2049 = vadd.s32 %v455, 504
      %v2050 = vstv %s1987
      %v2051 = vadd.s32 %v2050, %v455
      %v2052 = vadd.s32 %v2050, %v456
      %v2053 = vadd.s32 %v2050, %v1988
      %v2054 = vadd.s32 %v2050, %v1989
      %v2055 = vadd.s32 %v2050, %v1990
      %v2056 = vadd.s32 %v2050, %v1991
      %v2057 = vadd.s32 %v2050, %v1992
      %v2058 = vadd.s32 %v2050, %v1993
      %v2059 = vadd.s32 %v2050, %v1994
      %v2060 = vadd.s32 %v2050, %v1995
      %v2061 = vadd.s32 %v2050, %v1996
      %v2062 = vadd.s32 %v2050, %v1997
      %v2063 = vadd.s32 %v2050, %v1998
      %v2064 = vadd.s32 %v2050, %v1999
      %v2065 = vadd.s32 %v2050, %v2000
      %v2066 = vadd.s32 %v2050, %v2001
      %v2067 = vadd.s32 %v2050, %v2002
      %v2068 = vadd.s32 %v2050, %v2003
      %v2069 = vadd.s32 %v2050, %v2004
      %v2070 = vadd.s32 %v2050, %v2005
      %v2071 = vadd.s32 %v2050, %v2006
      %v2072 = vadd.s32 %v2050, %v2007
      %v2073 = vadd.s32 %v2050, %v2008
      %v2074 = vadd.s32 %v2050, %v2009
      %v2075 = vadd.s32 %v2050, %v2010
      %v2076 = vadd.s32 %v2050, %v2011
      %v2077 = vadd.s32 %v2050, %v2012
      %v2078 = vadd.s32 %v2050, %v2013
      %v2079 = vadd.s32 %v2050, %v2014
      %v2080 = vadd.s32 %v2050, %v2015
      %v2081 = vadd.s32 %v2050, %v2016
      %v2082 = vadd.s32 %v2050, %v2017
      %v2083 = vadd.s32 %v2050, %v2018
      %v2084 = vadd.s32 %v2050, %v2019
      %v2085 = vadd.s32 %v2050, %v2020
      %v2086 = vadd.s32 %v2050, %v2021
      %v2087 = vadd.s32 %v2050, %v2022
      %v2088 = vadd.s32 %v2050, %v2023
      %v2089 = vadd.s32 %v2050, %v2024
      %v2090 = vadd.s32 %v2050, %v2025
      %v2091 = vadd.s32 %v2050, %v2026
      %v2092 = vadd.s32 %v2050, %v2027
      %v2093 = vadd.s32 %v2050, %v2028
      %v2094 = vadd.s32 %v2050, %v2029
      %v2095 = vadd.s32 %v2050, %v2030
      %v2096 = vadd.s32 %v2050, %v2031
      %v2097 = vadd.s32 %v2050, %v2032
      %v2098 = vadd.s32 %v2050, %v2033
      %v2099 = vadd.s32 %v2050, %v2034
      %v2100 = vadd.s32 %v2050, %v2035
      %v2101 = vadd.s32 %v2050, %v2036
      %v2102 = vadd.s32 %v2050, %v2037
      %v2103 = vadd.s32 %v2050, %v2038
      %v2104 = vadd.s32 %v2050, %v2039
      %v2105 = vadd.s32 %v2050, %v2040
      %v2106 = vadd.s32 %v2050, %v2041
      %v2107 = vadd.s32 %v2050, %v2042
      %v2108 = vadd.s32 %v2050, %v2043
      %v2109 = vadd.s32 %v2050, %v2044
      %v2110 = vadd.s32 %v2050, %v2045
      %v2111 = vadd.s32 %v2050, %v2046
      %v2112 = vadd.s32 %v2050, %v2047
      %v2113 = vadd.s32 %v2050, %v2048
      %v2114 = vadd.s32 %v2050, %v2049
      %vm2115 = vcmp.lt.s32.totalorder %v2051, 1200
      %vm2116 = vcmp.lt.s32.totalorder %v2052, 1200
      %vm2117 = vcmp.lt.s32.totalorder %v2053, 1200
      %vm2118 = vcmp.lt.s32.totalorder %v2054, 1200
      %vm2119 = vcmp.lt.s32.totalorder %v2055, 1200
      %vm2120 = vcmp.lt.s32.totalorder %v2056, 1200
      %vm2121 = vcmp.lt.s32.totalorder %v2057, 1200
      %vm2122 = vcmp.lt.s32.totalorder %v2058, 1200
      %vm2123 = vcmp.lt.s32.totalorder %v2059, 1200
      %vm2124 = vcmp.lt.s32.totalorder %v2060, 1200
      %vm2125 = vcmp.lt.s32.totalorder %v2061, 1200
      %vm2126 = vcmp.lt.s32.totalorder %v2062, 1200
      %vm2127 = vcmp.lt.s32.totalorder %v2063, 1200
      %vm2128 = vcmp.lt.s32.totalorder %v2064, 1200
      %vm2129 = vcmp.lt.s32.totalorder %v2065, 1200
      %vm2130 = vcmp.lt.s32.totalorder %v2066, 1200
      %vm2131 = vcmp.lt.s32.totalorder %v2067, 1200
      %vm2132 = vcmp.lt.s32.totalorder %v2068, 1200
      %vm2133 = vcmp.lt.s32.totalorder %v2069, 1200
      %vm2134 = vcmp.lt.s32.totalorder %v2070, 1200
      %vm2135 = vcmp.lt.s32.totalorder %v2071, 1200
      %vm2136 = vcmp.lt.s32.totalorder %v2072, 1200
      %vm2137 = vcmp.lt.s32.totalorder %v2073, 1200
      %vm2138 = vcmp.lt.s32.totalorder %v2074, 1200
      %vm2139 = vcmp.lt.s32.totalorder %v2075, 1200
      %vm2140 = vcmp.lt.s32.totalorder %v2076, 1200
      %vm2141 = vcmp.lt.s32.totalorder %v2077, 1200
      %vm2142 = vcmp.lt.s32.totalorder %v2078, 1200
      %vm2143 = vcmp.lt.s32.totalorder %v2079, 1200
      %vm2144 = vcmp.lt.s32.totalorder %v2080, 1200
      %vm2145 = vcmp.lt.s32.totalorder %v2081, 1200
      %vm2146 = vcmp.lt.s32.totalorder %v2082, 1200
      %vm2147 = vcmp.lt.s32.totalorder %v2083, 1200
      %vm2148 = vcmp.lt.s32.totalorder %v2084, 1200
      %vm2149 = vcmp.lt.s32.totalorder %v2085, 1200
      %vm2150 = vcmp.lt.s32.totalorder %v2086, 1200
      %vm2151 = vcmp.lt.s32.totalorder %v2087, 1200
      %vm2152 = vcmp.lt.s32.totalorder %v2088, 1200
      %vm2153 = vcmp.lt.s32.totalorder %v2089, 1200
      %vm2154 = vcmp.lt.s32.totalorder %v2090, 1200
      %vm2155 = vcmp.lt.s32.totalorder %v2091, 1200
      %vm2156 = vcmp.lt.s32.totalorder %v2092, 1200
      %vm2157 = vcmp.lt.s32.totalorder %v2093, 1200
      %vm2158 = vcmp.lt.s32.totalorder %v2094, 1200
      %vm2159 = vcmp.lt.s32.totalorder %v2095, 1200
      %vm2160 = vcmp.lt.s32.totalorder %v2096, 1200
      %vm2161 = vcmp.lt.s32.totalorder %v2097, 1200
      %vm2162 = vcmp.lt.s32.totalorder %v2098, 1200
      %vm2163 = vcmp.lt.s32.totalorder %v2099, 1200
      %vm2164 = vcmp.lt.s32.totalorder %v2100, 1200
      %vm2165 = vcmp.lt.s32.totalorder %v2101, 1200
      %vm2166 = vcmp.lt.s32.totalorder %v2102, 1200
      %vm2167 = vcmp.lt.s32.totalorder %v2103, 1200
      %vm2168 = vcmp.lt.s32.totalorder %v2104, 1200
      %vm2169 = vcmp.lt.s32.totalorder %v2105, 1200
      %vm2170 = vcmp.lt.s32.totalorder %v2106, 1200
      %vm2171 = vcmp.lt.s32.totalorder %v2107, 1200
      %vm2172 = vcmp.lt.s32.totalorder %v2108, 1200
      %vm2173 = vcmp.lt.s32.totalorder %v2109, 1200
      %vm2174 = vcmp.lt.s32.totalorder %v2110, 1200
      %vm2175 = vcmp.lt.s32.totalorder %v2111, 1200
      %vm2176 = vcmp.lt.s32.totalorder %v2112, 1200
      %vm2177 = vcmp.lt.s32.totalorder %v2113, 1200
      %vm2178 = vcmp.lt.s32.totalorder %v2114, 1200
      %v2179 = vsel %vm2115, 1, 0
      %v2180 = vsel %vm2116, 1, 0
      %v2181 = vsel %vm2117, 1, 0
      %v2182 = vsel %vm2118, 1, 0
      %v2183 = vsel %vm2119, 1, 0
      %v2184 = vsel %vm2120, 1, 0
      %v2185 = vsel %vm2121, 1, 0
      %v2186 = vsel %vm2122, 1, 0
      %v2187 = vsel %vm2123, 1, 0
      %v2188 = vsel %vm2124, 1, 0
      %v2189 = vsel %vm2125, 1, 0
      %v2190 = vsel %vm2126, 1, 0
      %v2191 = vsel %vm2127, 1, 0
      %v2192 = vsel %vm2128, 1, 0
      %v2193 = vsel %vm2129, 1, 0
      %v2194 = vsel %vm2130, 1, 0
      %v2195 = vsel %vm2131, 1, 0
      %v2196 = vsel %vm2132, 1, 0
      %v2197 = vsel %vm2133, 1, 0
      %v2198 = vsel %vm2134, 1, 0
      %v2199 = vsel %vm2135, 1, 0
      %v2200 = vsel %vm2136, 1, 0
      %v2201 = vsel %vm2137, 1, 0
      %v2202 = vsel %vm2138, 1, 0
      %v2203 = vsel %vm2139, 1, 0
      %v2204 = vsel %vm2140, 1, 0
      %v2205 = vsel %vm2141, 1, 0
      %v2206 = vsel %vm2142, 1, 0
      %v2207 = vsel %vm2143, 1, 0
      %v2208 = vsel %vm2144, 1, 0
      %v2209 = vsel %vm2145, 1, 0
      %v2210 = vsel %vm2146, 1, 0
      %v2211 = vsel %vm2147, 1, 0
      %v2212 = vsel %vm2148, 1, 0
      %v2213 = vsel %vm2149, 1, 0
      %v2214 = vsel %vm2150, 1, 0
      %v2215 = vsel %vm2151, 1, 0
      %v2216 = vsel %vm2152, 1, 0
      %v2217 = vsel %vm2153, 1, 0
      %v2218 = vsel %vm2154, 1, 0
      %v2219 = vsel %vm2155, 1, 0
      %v2220 = vsel %vm2156, 1, 0
      %v2221 = vsel %vm2157, 1, 0
      %v2222 = vsel %vm2158, 1, 0
      %v2223 = vsel %vm2159, 1, 0
      %v2224 = vsel %vm2160, 1, 0
      %v2225 = vsel %vm2161, 1, 0
      %v2226 = vsel %vm2162, 1, 0
      %v2227 = vsel %vm2163, 1, 0
      %v2228 = vsel %vm2164, 1, 0
      %v2229 = vsel %vm2165, 1, 0
      %v2230 = vsel %vm2166, 1, 0
      %v2231 = vsel %vm2167, 1, 0
      %v2232 = vsel %vm2168, 1, 0
      %v2233 = vsel %vm2169, 1, 0
      %v2234 = vsel %vm2170, 1, 0
      %v2235 = vsel %vm2171, 1, 0
      %v2236 = vsel %vm2172, 1, 0
      %v2237 = vsel %vm2173, 1, 0
      %v2238 = vsel %vm2174, 1, 0
      %v2239 = vsel %vm2175, 1, 0
      %v2240 = vsel %vm2176, 1, 0
      %v2241 = vsel %vm2177, 1, 0
      %v2242 = vsel %vm2178, 1, 0
      %vm2243 = vcmp.eq.s32.totalorder %v2179, 1
      %vm2244 = vcmp.eq.s32.totalorder %v2180, 1
      %vm2245 = vcmp.eq.s32.totalorder %v2181, 1
      %vm2246 = vcmp.eq.s32.totalorder %v2182, 1
      %vm2247 = vcmp.eq.s32.totalorder %v2183, 1
      %vm2248 = vcmp.eq.s32.totalorder %v2184, 1
      %vm2249 = vcmp.eq.s32.totalorder %v2185, 1
      %vm2250 = vcmp.eq.s32.totalorder %v2186, 1
      %vm2251 = vcmp.eq.s32.totalorder %v2187, 1
      %vm2252 = vcmp.eq.s32.totalorder %v2188, 1
      %vm2253 = vcmp.eq.s32.totalorder %v2189, 1
      %vm2254 = vcmp.eq.s32.totalorder %v2190, 1
      %vm2255 = vcmp.eq.s32.totalorder %v2191, 1
      %vm2256 = vcmp.eq.s32.totalorder %v2192, 1
      %vm2257 = vcmp.eq.s32.totalorder %v2193, 1
      %vm2258 = vcmp.eq.s32.totalorder %v2194, 1
      %vm2259 = vcmp.eq.s32.totalorder %v2195, 1
      %vm2260 = vcmp.eq.s32.totalorder %v2196, 1
      %vm2261 = vcmp.eq.s32.totalorder %v2197, 1
      %vm2262 = vcmp.eq.s32.totalorder %v2198, 1
      %vm2263 = vcmp.eq.s32.totalorder %v2199, 1
      %vm2264 = vcmp.eq.s32.totalorder %v2200, 1
      %vm2265 = vcmp.eq.s32.totalorder %v2201, 1
      %vm2266 = vcmp.eq.s32.totalorder %v2202, 1
      %vm2267 = vcmp.eq.s32.totalorder %v2203, 1
      %vm2268 = vcmp.eq.s32.totalorder %v2204, 1
      %vm2269 = vcmp.eq.s32.totalorder %v2205, 1
      %vm2270 = vcmp.eq.s32.totalorder %v2206, 1
      %vm2271 = vcmp.eq.s32.totalorder %v2207, 1
      %vm2272 = vcmp.eq.s32.totalorder %v2208, 1
      %vm2273 = vcmp.eq.s32.totalorder %v2209, 1
      %vm2274 = vcmp.eq.s32.totalorder %v2210, 1
      %vm2275 = vcmp.eq.s32.totalorder %v2211, 1
      %vm2276 = vcmp.eq.s32.totalorder %v2212, 1
      %vm2277 = vcmp.eq.s32.totalorder %v2213, 1
      %vm2278 = vcmp.eq.s32.totalorder %v2214, 1
      %vm2279 = vcmp.eq.s32.totalorder %v2215, 1
      %vm2280 = vcmp.eq.s32.totalorder %v2216, 1
      %vm2281 = vcmp.eq.s32.totalorder %v2217, 1
      %vm2282 = vcmp.eq.s32.totalorder %v2218, 1
      %vm2283 = vcmp.eq.s32.totalorder %v2219, 1
      %vm2284 = vcmp.eq.s32.totalorder %v2220, 1
      %vm2285 = vcmp.eq.s32.totalorder %v2221, 1
      %vm2286 = vcmp.eq.s32.totalorder %v2222, 1
      %vm2287 = vcmp.eq.s32.totalorder %v2223, 1
      %vm2288 = vcmp.eq.s32.totalorder %v2224, 1
      %vm2289 = vcmp.eq.s32.totalorder %v2225, 1
      %vm2290 = vcmp.eq.s32.totalorder %v2226, 1
      %vm2291 = vcmp.eq.s32.totalorder %v2227, 1
      %vm2292 = vcmp.eq.s32.totalorder %v2228, 1
      %vm2293 = vcmp.eq.s32.totalorder %v2229, 1
      %vm2294 = vcmp.eq.s32.totalorder %v2230, 1
      %vm2295 = vcmp.eq.s32.totalorder %v2231, 1
      %vm2296 = vcmp.eq.s32.totalorder %v2232, 1
      %vm2297 = vcmp.eq.s32.totalorder %v2233, 1
      %vm2298 = vcmp.eq.s32.totalorder %v2234, 1
      %vm2299 = vcmp.eq.s32.totalorder %v2235, 1
      %vm2300 = vcmp.eq.s32.totalorder %v2236, 1
      %vm2301 = vcmp.eq.s32.totalorder %v2237, 1
      %vm2302 = vcmp.eq.s32.totalorder %v2238, 1
      %vm2303 = vcmp.eq.s32.totalorder %v2239, 1
      %vm2304 = vcmp.eq.s32.totalorder %v2240, 1
      %vm2305 = vcmp.eq.s32.totalorder %v2241, 1
      %vm2306 = vcmp.eq.s32.totalorder %v2242, 1
      %v2307 = vsel %vm2243, %v1923, 0.0
      %v2308 = vsel %vm2244, %v1924, 0.0
      %v2309 = vsel %vm2245, %v1925, 0.0
      %v2310 = vsel %vm2246, %v1926, 0.0
      %v2311 = vsel %vm2247, %v1927, 0.0
      %v2312 = vsel %vm2248, %v1928, 0.0
      %v2313 = vsel %vm2249, %v1929, 0.0
      %v2314 = vsel %vm2250, %v1930, 0.0
      %v2315 = vsel %vm2251, %v1931, 0.0
      %v2316 = vsel %vm2252, %v1932, 0.0
      %v2317 = vsel %vm2253, %v1933, 0.0
      %v2318 = vsel %vm2254, %v1934, 0.0
      %v2319 = vsel %vm2255, %v1935, 0.0
      %v2320 = vsel %vm2256, %v1936, 0.0
      %v2321 = vsel %vm2257, %v1937, 0.0
      %v2322 = vsel %vm2258, %v1938, 0.0
      %v2323 = vsel %vm2259, %v1939, 0.0
      %v2324 = vsel %vm2260, %v1940, 0.0
      %v2325 = vsel %vm2261, %v1941, 0.0
      %v2326 = vsel %vm2262, %v1942, 0.0
      %v2327 = vsel %vm2263, %v1943, 0.0
      %v2328 = vsel %vm2264, %v1944, 0.0
      %v2329 = vsel %vm2265, %v1945, 0.0
      %v2330 = vsel %vm2266, %v1946, 0.0
      %v2331 = vsel %vm2267, %v1947, 0.0
      %v2332 = vsel %vm2268, %v1948, 0.0
      %v2333 = vsel %vm2269, %v1949, 0.0
      %v2334 = vsel %vm2270, %v1950, 0.0
      %v2335 = vsel %vm2271, %v1951, 0.0
      %v2336 = vsel %vm2272, %v1952, 0.0
      %v2337 = vsel %vm2273, %v1953, 0.0
      %v2338 = vsel %vm2274, %v1954, 0.0
      %v2339 = vsel %vm2275, %v1955, 0.0
      %v2340 = vsel %vm2276, %v1956, 0.0
      %v2341 = vsel %vm2277, %v1957, 0.0
      %v2342 = vsel %vm2278, %v1958, 0.0
      %v2343 = vsel %vm2279, %v1959, 0.0
      %v2344 = vsel %vm2280, %v1960, 0.0
      %v2345 = vsel %vm2281, %v1961, 0.0
      %v2346 = vsel %vm2282, %v1962, 0.0
      %v2347 = vsel %vm2283, %v1963, 0.0
      %v2348 = vsel %vm2284, %v1964, 0.0
      %v2349 = vsel %vm2285, %v1965, 0.0
      %v2350 = vsel %vm2286, %v1966, 0.0
      %v2351 = vsel %vm2287, %v1967, 0.0
      %v2352 = vsel %vm2288, %v1968, 0.0
      %v2353 = vsel %vm2289, %v1969, 0.0
      %v2354 = vsel %vm2290, %v1970, 0.0
      %v2355 = vsel %vm2291, %v1971, 0.0
      %v2356 = vsel %vm2292, %v1972, 0.0
      %v2357 = vsel %vm2293, %v1973, 0.0
      %v2358 = vsel %vm2294, %v1974, 0.0
      %v2359 = vsel %vm2295, %v1975, 0.0
      %v2360 = vsel %vm2296, %v1976, 0.0
      %v2361 = vsel %vm2297, %v1977, 0.0
      %v2362 = vsel %vm2298, %v1978, 0.0
      %v2363 = vsel %vm2299, %v1979, 0.0
      %v2364 = vsel %vm2300, %v1980, 0.0
      %v2365 = vsel %vm2301, %v1981, 0.0
      %v2366 = vsel %vm2302, %v1982, 0.0
      %v2367 = vsel %vm2303, %v1983, 0.0
      %v2368 = vsel %vm2304, %v1984, 0.0
      %v2369 = vsel %vm2305, %v1985, 0.0
      %v2370 = vsel %vm2306, %v1986, 0.0
      %v2371 = vld [vmem:[%s410] sm:$0xf]
      %v2372 = vlaneseq
      %v2373 = vshrl.u32 %v2372, 7
      %v2374 = vsub.s32 0, %v2373
      %v2375 = vrot.slane %v2371, %v2374
      %v2376 = vlaneseq
      %v2377 = vshrl.u32 %v2376, 7
      %v2378 = vsub.s32 1, %v2377
      %v2379 = vrot.slane %v2371, %v2378
      %v2380 = vlaneseq
      %v2381 = vshrl.u32 %v2380, 7
      %v2382 = vsub.s32 2, %v2381
      %v2383 = vrot.slane %v2371, %v2382
      %v2384 = vlaneseq
      %v2385 = vshrl.u32 %v2384, 7
      %v2386 = vsub.s32 3, %v2385
      %v2387 = vrot.slane %v2371, %v2386
      %vm2388 = vcmp.eq.s32.totalorder %v455, %v2375
      %vm2389 = vcmp.eq.s32.totalorder %v455, %v2379
      %vm2390 = vcmp.eq.s32.totalorder %v455, %v2383
      %vm2391 = vcmp.eq.s32.totalorder %v455, %v2387
      %v2392 = vsel %vm2388, 1, 0
      %v2393 = vsel %vm2389, 1, 0
      %v2394 = vsel %vm2390, 1, 0
      %v2395 = vsel %vm2391, 1, 0
      %v2396 = vcvt.s32.f32 %v2392
      %v2397 = vcvt.s32.f32 %v2393
      %v2398 = vcvt.s32.f32 %v2394
      %v2399 = vcvt.s32.f32 %v2395
      %v2400 = vld [vmem:[%s445] sm:$0xff]
      %2401 = vmatprep.subr.mxu0 0.0
      %2402 = vmatpush1.msra.mxu0 %v2307
      %2403 = vmatprep.subr.mxu0 0.0
      %2404 = vmatpush1.msra.mxu0 %v2308
      %2405 = vmatprep.subr.mxu0 0.0
      %2406 = vmatpush1.msra.mxu0 %v2309
      %2407 = vmatprep.subr.mxu0 0.0
      %2408 = vmatpush1.msra.mxu0 %v2310
      %2409 = vmatprep.subr.mxu0 0.0
      %2410 = vmatpush1.msra.mxu0 %v2311
      %2411 = vmatprep.subr.mxu0 0.0
      %2412 = vmatpush1.msra.mxu0 %v2312
      %2413 = vmatprep.subr.mxu0 0.0
      %2414 = vmatpush1.msra.mxu0 %v2313
      %2415 = vmatprep.subr.mxu0 0.0
      %2416 = vmatpush1.msra.mxu0 %v2314
      %2417 = vmatprep.subr.mxu0 0.0
      %2418 = vmatpush1.msra.mxu0 %v2315
      %2419 = vmatprep.subr.mxu0 0.0
      %2420 = vmatpush1.msra.mxu0 %v2316
      %2421 = vmatprep.subr.mxu0 0.0
      %2422 = vmatpush1.msra.mxu0 %v2317
      %2423 = vmatprep.subr.mxu0 0.0
      %2424 = vmatpush1.msra.mxu0 %v2318
      %2425 = vmatprep.subr.mxu0 0.0
      %2426 = vmatpush1.msra.mxu0 %v2319
      %2427 = vmatprep.subr.mxu0 0.0
      %2428 = vmatpush1.msra.mxu0 %v2320
      %2429 = vmatprep.subr.mxu0 0.0
      %2430 = vmatpush1.msra.mxu0 %v2321
      %2431 = vmatprep.subr.mxu0 0.0
      %2432 = vmatpush1.msra.mxu0 %v2322
      %2433 = vmatprep.subr.mxu0 0.0
      %2434 = vmatpush1.msra.mxu0 %v2323
      %2435 = vmatprep.subr.mxu0 0.0
      %2436 = vmatpush1.msra.mxu0 %v2324
      %2437 = vmatprep.subr.mxu0 0.0
      %2438 = vmatpush1.msra.mxu0 %v2325
      %2439 = vmatprep.subr.mxu0 0.0
      %2440 = vmatpush1.msra.mxu0 %v2326
      %2441 = vmatprep.subr.mxu0 0.0
      %2442 = vmatpush1.msra.mxu0 %v2327
      %2443 = vmatprep.subr.mxu0 0.0
      %2444 = vmatpush1.msra.mxu0 %v2328
      %2445 = vmatprep.subr.mxu0 0.0
      %2446 = vmatpush1.msra.mxu0 %v2329
      %2447 = vmatprep.subr.mxu0 0.0
      %2448 = vmatpush1.msra.mxu0 %v2330
      %2449 = vmatprep.subr.mxu0 0.0
      %2450 = vmatpush1.msra.mxu0 %v2331
      %2451 = vmatprep.subr.mxu0 0.0
      %2452 = vmatpush1.msra.mxu0 %v2332
      %2453 = vmatprep.subr.mxu0 0.0
      %2454 = vmatpush1.msra.mxu0 %v2333
      %2455 = vmatprep.subr.mxu0 0.0
      %2456 = vmatpush1.msra.mxu0 %v2334
      %2457 = vmatprep.subr.mxu0 0.0
      %2458 = vmatpush1.msra.mxu0 %v2335
      %2459 = vmatprep.subr.mxu0 0.0
      %2460 = vmatpush1.msra.mxu0 %v2336
      %2461 = vmatprep.subr.mxu0 0.0
      %2462 = vmatpush1.msra.mxu0 %v2337
      %2463 = vmatprep.subr.mxu0 0.0
      %2464 = vmatpush1.msra.mxu0 %v2338
      %2465 = vmatprep.mubr.f32.mxu0 %v2397
      %2466 = vmatmul.mubr.f32.gmra.mrb[0].mxu0 %v2396
      %v2467 = vpop.f32.mrb[0].mxu0
      %v2468 = vadd.f32 0.0, %v2467
      %v2469 = vpop.f32.mrb[0].mxu0
      %2470 = vdwg.mxu0
      %2471 = vmatprep.subr.mxu0 0.0
      %2472 = vmatpush1.msra.mxu0 %v2339
      %2473 = vmatprep.subr.mxu0 0.0
      %2474 = vmatpush1.msra.mxu0 %v2340
      %2475 = vmatprep.subr.mxu0 0.0
      %2476 = vmatpush1.msra.mxu0 %v2341
      %2477 = vmatprep.subr.mxu0 0.0
      %2478 = vmatpush1.msra.mxu0 %v2342
      %2479 = vmatprep.subr.mxu0 0.0
      %2480 = vmatpush1.msra.mxu0 %v2343
      %2481 = vmatprep.subr.mxu0 0.0
      %2482 = vmatpush1.msra.mxu0 %v2344
      %2483 = vmatprep.subr.mxu0 0.0
      %2484 = vmatpush1.msra.mxu0 %v2345
      %2485 = vmatprep.subr.mxu0 0.0
      %2486 = vmatpush1.msra.mxu0 %v2346
      %2487 = vmatprep.subr.mxu0 0.0
      %2488 = vmatpush1.msra.mxu0 %v2347
      %2489 = vmatprep.subr.mxu0 0.0
      %2490 = vmatpush1.msra.mxu0 %v2348
      %2491 = vmatprep.subr.mxu0 0.0
      %2492 = vmatpush1.msra.mxu0 %v2349
      %2493 = vmatprep.subr.mxu0 0.0
      %2494 = vmatpush1.msra.mxu0 %v2350
      %2495 = vmatprep.subr.mxu0 0.0
      %2496 = vmatpush1.msra.mxu0 %v2351
      %2497 = vmatprep.subr.mxu0 0.0
      %2498 = vmatpush1.msra.mxu0 %v2352
      %2499 = vmatprep.subr.mxu0 0.0
      %2500 = vmatpush1.msra.mxu0 %v2353
      %2501 = vmatprep.subr.mxu0 0.0
      %2502 = vmatpush1.msra.mxu0 %v2354
      %2503 = vmatprep.subr.mxu0 0.0
      %2504 = vmatpush1.msra.mxu0 %v2355
      %2505 = vmatprep.subr.mxu0 0.0
      %2506 = vmatpush1.msra.mxu0 %v2356
      %2507 = vmatprep.subr.mxu0 0.0
      %2508 = vmatpush1.msra.mxu0 %v2357
      %2509 = vmatprep.subr.mxu0 0.0
      %2510 = vmatpush1.msra.mxu0 %v2358
      %2511 = vmatprep.subr.mxu0 0.0
      %2512 = vmatpush1.msra.mxu0 %v2359
      %2513 = vmatprep.subr.mxu0 0.0
      %2514 = vmatpush1.msra.mxu0 %v2360
      %2515 = vmatprep.subr.mxu0 0.0
      %2516 = vmatpush1.msra.mxu0 %v2361
      %2517 = vmatprep.subr.mxu0 0.0
      %2518 = vmatpush1.msra.mxu0 %v2362
      %2519 = vmatprep.subr.mxu0 0.0
      %2520 = vmatpush1.msra.mxu0 %v2363
      %2521 = vmatprep.subr.mxu0 0.0
      %2522 = vmatpush1.msra.mxu0 %v2364
      %2523 = vmatprep.subr.mxu0 0.0
      %2524 = vmatpush1.msra.mxu0 %v2365
      %2525 = vmatprep.subr.mxu0 0.0
      %2526 = vmatpush1.msra.mxu0 %v2366
      %2527 = vmatprep.subr.mxu0 0.0
      %2528 = vmatpush1.msra.mxu0 %v2367
      %2529 = vmatprep.subr.mxu0 0.0
      %2530 = vmatpush1.msra.mxu0 %v2368
      %2531 = vmatprep.subr.mxu0 0.0
      %2532 = vmatpush1.msra.mxu0 %v2369
      %2533 = vmatprep.subr.mxu0 0.0
      %2534 = vmatpush1.msra.mxu0 %v2370
      %2535 = vmatprep.mubr.f32.mxu0 %v2399
      %2536 = vmatmul.mubr.f32.gmra.mrb[0].mxu0 %v2398
      %v2537 = vpop.f32.mrb[0].mxu0
      %v2538 = vadd.f32 %v2468, %v2537
      %v2539 = vpop.f32.mrb[0].mxu0
      %2540 = vdwg.mxu0
      %v2541 = vadd.f32 %v2400, %v2538
      %2542 = vst [vmem:[%s445] sm:$0xff] %v2541
      %p2543 = scmp.lt.s32.totalorder %s21, 1
      %s2544 = scalar_select %p2543, %s21, 1
      %s2545 = smul.addr %s2544, 8
      %s2546 = scalar_lea.vmem %s6, %s2545
      // Predicated region
      $region49: #{evidential_forward.1} parent=43 // pred_check
        %p2547 = pneg %p212
      $region50: #{evidential_forward.1} parent=43 // pred_check_branch
        %2549 = sbr.rel (%p2547) target = $region52
      $region51: #{evidential_forward.1} parent=43 // pred_region
        _
      $region52: #{evidential_forward.1} parent=43 // pred_fallthru
        _
    $region44: #{evidential_forward.1} parent=5 // pred_fallthru
      _
    %p2550 = scmp.le.s32.totalorder 2, %s12
    // Predicated region
    $region53: #{evidential_forward.1} parent=5 // pred_check
      %p2551 = pneg %p2550
    $region54: #{evidential_forward.1} parent=5 // pred_check_branch
      %2553 = sbr.rel (%p2551) target = $region56
    $region55: #{evidential_forward.1} parent=5 // pred_region
      %s2554 = ssub.s32 %s12, 2
      // Predicated region
      $region57: #{evidential_forward.1} parent=55 // pred_check
        %p2555 = pneg %p218
      $region58: #{evidential_forward.1} parent=55 // pred_check_branch
        %2557 = sbr.rel (%p2555) target = $region60
      $region59: #{evidential_forward.1} parent=55 // pred_region
        %p2558 = scmp.lt.s32.totalorder %s23, 1
        %s2559 = scalar_select %p2558, %s23, 1
        %s2560 = smul.addr %s2559, 8
        %s2561 = scalar_lea.vmem %s6, %s2560
      $region60: #{evidential_forward.1} parent=55 // pred_fallthru
        _
    $region56: #{evidential_forward.1} parent=5 // pred_fallthru
      _
  $region6: #{evidential_forward.1} parent=0 // loop_footer
    %s16 = sadd.s32 1, %s12
  $region7: #{evidential_forward.1} parent=0 // loop_footer_branch
    %11 = sbr.rel target = $region3
  $region8: #{evidential_forward.1} parent=0 // loop_exit
    _

</llo_original>
